<compile_context>
chip_gen: v5e
topology: v5e:2x2
jax: 0.10.0
libtpu: 0.0.40
codegen_flags: <defaults>
</compile_context>

<pallas_src>
import functools

import jax
import jax.numpy as jnp
import numpy as np
from jax.experimental import pallas as pl
from jax.experimental.pallas import tpu as pltpu

EPS = 1e-5  # PyTorch BatchNorm1d default eps


# ----------------------------------------------------------------------------------------------
# Kernel: one grid step = one batch shard (R = Bl*T rows, (b,t) on sublanes, features on lanes).
# Loops over all NB Mixer_Blocks in-kernel; weights are fully resident in VMEM.
# ----------------------------------------------------------------------------------------------
def mixer_kernel(x_ref, s_ref, wtbd_ref, wS_ref, ws2_ref, wC_ref, wf2_ref,
                 wo_ref, tvec_ref, fvec_ref, o_ref, *, NB, F, E, cdt):
    mm = lambda a, b: jnp.dot(a, b, preferred_element_type=jnp.float32)
    relu = lambda v: jnp.maximum(v, 0.0)

    act = x_ref[...]                       # (R, F) f32 activation carry (value, not scratch)
    s = s_ref[...]                         # (R, S) already in compute dtype, reused every block

    # NB is small & static -> static unroll keeps every ref index static.
    # TODO(synk): for large NB switch to lax.fori_loop with `.at[nb]` ref views.
    for ib in range(NB):
        # ---- packed per-block vectors (f32) ------------------------------------------------
        bt = tvec_ref[ib, :, 0:1]          # (R, 1) time-channel vectors, broadcast over lanes
        tsc = tvec_ref[ib, :, 1:2]
        tsh = tvec_ref[ib, :, 2:3]
        bs1_bsp = fvec_ref[ib, 0:1, :2 * E]          # feature-channel vectors, broadcast over rows
        ssc = fvec_ref[ib, 1:2, :E]
        ssh = fvec_ref[ib, 2:3, :E]                  # bs2 already folded in
        bf1_bfp = fvec_ref[ib, 3:4, :2 * F]
        fsc = fvec_ref[ib, 4:5, :F]
        fsh = fvec_ref[ib, 5:6, :F]                  # bf2 already folded in
        bo = fvec_ref[ib, 6:7, :2 * E]

        a = act.astype(cdt)

        # ---- MLP_Time_Block: single block-diagonal (R,R)x(R,F) matmul + residual + folded BN(T)
        v = relu(mm(wtbd_ref[ib], a) + bt)
        h = (act + v) * tsc + tsh                                         # (R, F) f32

        # ---- MLP_Feat on static features (S -> E): [mlp1 | projector] in one matmul ---------
        sp = mm(s, wS_ref[ib]) + bs1_bsp                                  # (R, 2E)
        us = mm(relu(sp[:, :E]).astype(cdt), ws2_ref[ib])
        z = (sp[:, E:] + us) * ssc + ssh                                  # (R, E) folded BN(E)

        # ---- MLP_Feat on concat([h, z]) ((F+E) -> F): concat realised as split matmuls ------
        cp = (mm(h.astype(cdt), wC_ref[ib, :F, :])
              + mm(z.astype(cdt), wC_ref[ib, F:F + E, :]) + bf1_bfp)      # (R, 2F)
        uf = mm(relu(cp[:, :F]).astype(cdt), wf2_ref[ib])
        w = (cp[:, F:] + uf) * fsc + fsh                                  # (R, F) folded BN(F)

        # ---- Mixer_Block projector (F -> 2E) -------------------------------------------------
        act = mm(w.astype(cdt), wo_ref[ib]) + bo                          # (R, 2E) == (R, F)

    o_ref[...] = act.astype(o_ref.dtype)


# ----------------------------------------------------------------------------------------------
# Host-side parameter packing (BN + mlp2-bias folded, weights pre-transposed / column-packed,
# time weights expanded block-diagonally so the time mix is one matmul over all (b,t) rows).
# ----------------------------------------------------------------------------------------------
def _fold_bn(g, be, rm, rv):
    sc = g * jax.lax.rsqrt(rv + EPS)
    return sc, be - rm * sc


def _pack_block_params(p, F, E, Bl, cdt):
    f32 = lambda a: jnp.asarray(a, jnp.float32)
    tsc, tsh = _fold_bn(f32(p["gt"]), f32(p["bet"]), f32(p["rmt"]), f32(p["rvt"]))
    ssc, ssh = _fold_bn(f32(p["gs"]), f32(p["bes"]), f32(p["rms"]), f32(p["rvs"]))
    fsc, fsh = _fold_bn(f32(p["gf"]), f32(p["bef"]), f32(p["rmf"]), f32(p["rvf"]))
    # mlp2 biases fold into the BN shift: (x + u + b2)*sc + sh == (x + u)*sc + (sh + b2*sc)
    ssh = ssh + f32(p["bs2"]) * ssc
    fsh = fsh + f32(p["bf2"]) * fsc

    wt_bd = jnp.kron(jnp.eye(Bl, dtype=jnp.float32), f32(p["wt"]))        # (Bl*T, Bl*T)
    wS = jnp.concatenate([f32(p["ws1"]).T, f32(p["wsp"]).T], axis=1)      # (S, 2E)
    ws2 = f32(p["ws2"]).T                                                 # (E, E)
    wC = jnp.concatenate([f32(p["wf1"]).T, f32(p["wfp"]).T], axis=1)      # (F+E, 2F)
    wf2 = f32(p["wf2"]).T                                                 # (F, F)
    wo = f32(p["wo"]).T                                                   # (F, 2E)

    tile = lambda v: jnp.tile(f32(v), Bl)                                 # (Bl*T,)
    tvec = jnp.stack([tile(p["bt"]), tile(tsc), tile(tsh)], axis=1)       # (Bl*T, 3)

    W = 2 * F
    def row(v):
        v = jnp.asarray(v, jnp.float32).reshape(-1)
        return jnp.pad(v, (0, W - v.shape[0]))
    fvec = jnp.stack([
        row(jnp.concatenate([f32(p["bs1"]), f32(p["bsp"])])),   # 0: [bs1 | bsp]   (2E)
        row(ssc), row(ssh),                                     # 1-2              (E)
        row(jnp.concatenate([f32(p["bf1"]), f32(p["bfp"])])),   # 3: [bf1 | bfp]   (2F)
        row(fsc), row(fsh),                                     # 4-5              (F)
        row(p["bo"]),                                           # 6: bo            (2E)
        jnp.zeros((W,), jnp.float32),                           # 7: pad -> full (8, 2F) tile
    ], axis=0)                                                  # (8, 2F)

    c = lambda a: a.astype(cdt)
    return c(wt_bd), c(wS), c(ws2), c(wC), c(wf2), c(wo), tvec, fvec


# ----------------------------------------------------------------------------------------------
# Wrapper: full Mixer forward (all blocks fused in one pallas_call, weights VMEM-resident).
# ----------------------------------------------------------------------------------------------
def mixer_pallas(x, s, params_list, *, batch_shards=1, compute_dtype=None,
                 vmem_limit_bytes=32 * 1024 * 1024):
    B, T, F = x.shape
    S = s.shape[-1]
    E = params_list[0]["ws1"].shape[0]
    NB = len(params_list)
    assert F == 2 * E, "stacked Mixer blocks require n_feat == 2*embed_dim"
    assert B % batch_shards == 0
    Bl = B // batch_shards
    R = Bl * T                                     # rows per shard, (b, t) flattened

    if compute_dtype is None:
        # bf16 operands once MXU dims are real-sized (v6e/v7x bf16-native MXU);
        # f32 at the toy sizes below so the reference check stays tight.
        compute_dtype = jnp.bfloat16 if max(T, F) >= 128 else jnp.float32

    packed = [_pack_block_params(p, F, E, Bl, compute_dtype) for p in params_list]
    wtbd_a, wS_a, ws2_a, wC_a, wf2_a, wo_a, tv_a, fv_a = (jnp.stack(z) for z in zip(*packed))

    # lane/sublane-dense row slabs: (b, t) rows on sublanes, features on lanes
    x_rows = jnp.asarray(x, jnp.float32).reshape(B * T, F)
    s_rows = jnp.asarray(s, compute_dtype).reshape(B * T, S)

    shard = lambda d1: pl.BlockSpec((R, d1), lambda sh: (sh, 0))
    # constant block index -> fetched once, resident in VMEM across all grid steps
    resident = lambda a: pl.BlockSpec(a.shape, lambda sh: (0,) * a.ndim)

    out_rows = pl.pallas_call(
        functools.partial(mixer_kernel, NB=NB, F=F, E=E, cdt=compute_dtype),
        out_shape=jax.ShapeDtypeStruct((B * T, 2 * E), jnp.float32),
        grid=(batch_shards,),
        in_specs=[
            shard(F),                 # x rows (per shard)
            shard(S),                 # s rows (per shard)
            resident(wtbd_a),         # block-diagonal time weights   (NB, R, R)
            resident(wS_a),           # [ws1 | wsp]^T                 (NB, S, 2E)
            resident(ws2_a),          # ws2^T                         (NB, E, E)
            resident(wC_a),           # [wf1 | wfp]^T                 (NB, F+E, 2F)
            resident(wf2_a),          # wf2^T                         (NB, F, F)
            resident(wo_a),           # wo^T                          (NB, F, 2E)
            resident(tv_a),           # time-channel vectors          (NB, R, 3)
            resident(fv_a),           # feature-channel vectors       (NB, 8, 2F)
        ],
        out_specs=shard(2 * E),
        compiler_params=pltpu.CompilerParams(
            dimension_semantics=("parallel",),     # v7x: shards split across the 2 TensorCores
            vmem_limit_bytes=vmem_limit_bytes,     # v7x <= ~48 MiB; v5e/v6e may raise to ~100 MiB
        ),
    )(x_rows, s_rows, wtbd_a, wS_a, ws2_a, wC_a, wf2_a, wo_a, tv_a, fv_a)

    return out_rows.reshape(B, T, 2 * E)


# ----------------------------------------------------------------------------------------------
# Pure-JAX reference (mirrors the PyTorch forward, eval mode) for correctness checking.
# ----------------------------------------------------------------------------------------------
def mixer_block_ref(x, s, p):
    v = jax.nn.relu(jnp.einsum("ut,btf->buf", p["wt"], x) + p["bt"][None, :, None])
    h = x + v
    h = (h - p["rmt"][None, :, None]) / jnp.sqrt(p["rvt"][None, :, None] + EPS) \
        * p["gt"][None, :, None] + p["bet"][None, :, None]
    vs = jax.nn.relu(s @ p["ws1"].T + p["bs1"])
    us = vs @ p["ws2"].T + p["bs2"]
    hs = s @ p["wsp"].T + p["bsp"]
    z = hs + us
    z = (z - p["rms"]) / jnp.sqrt(p["rvs"] + EPS) * p["gs"] + p["bes"]
    c = jnp.concatenate([h, z], axis=-1)
    vf = jax.nn.relu(c @ p["wf1"].T + p["bf1"])
    uf = vf @ p["wf2"].T + p["bf2"]
    hf = c @ p["wfp"].T + p["bfp"]
    w = hf + uf
    w = (w - p["rmf"]) / jnp.sqrt(p["rvf"] + EPS) * p["gf"] + p["bef"]
    return w @ p["wo"].T + p["bo"]


# ----------------------------------------------------------------------------------------------
# Deterministic synthetic parameters (PyTorch Linear.weight convention: (out, in)).
# ----------------------------------------------------------------------------------------------
def init_block_params(key, F, S, T, E):
    keys = iter(jax.random.split(key, 32))
    nrm = lambda shape, scale=0.1: (scale * jax.random.normal(next(keys), shape)).astype(jnp.float32)
    uni = lambda shape: jax.random.uniform(next(keys), shape, minval=0.5, maxval=1.5).astype(jnp.float32)
    return dict(
        wt=nrm((T, T)), bt=nrm((T,)),
        gt=1.0 + nrm((T,)), bet=nrm((T,)), rmt=nrm((T,)), rvt=uni((T,)),
        ws1=nrm((E, S)), bs1=nrm((E,)), ws2=nrm((E, E)), bs2=nrm((E,)),
        wsp=nrm((E, S)), bsp=nrm((E,)),
        gs=1.0 + nrm((E,)), bes=nrm((E,)), rms=nrm((E,)), rvs=uni((E,)),
        wf1=nrm((F, F + E)), bf1=nrm((F,)), wf2=nrm((F, F)), bf2=nrm((F,)),
        wfp=nrm((F, F + E)), bfp=nrm((F,)),
        gf=1.0 + nrm((F,)), bef=nrm((F,)), rmf=nrm((F,)), rvf=uni((F,)),
        wo=nrm((2 * E, F)), bo=nrm((2 * E,)),
    )


if __name__ == "__main__":
    B, T, E, S = 2, 8, 8, 4          # batch, fcst_h, embed_dim, n_static_feat
    F = 2 * E                         # n_feat == embed_dim*2 so Mixer blocks can be stacked
    num_blocks = 2

    key = jax.random.PRNGKey(0)
    kx, ks_, kp = jax.random.split(key, 3)
    x = jax.random.normal(kx, (B, T, F), dtype=jnp.float32)
    s = jax.random.normal(ks_, (B, T, S), dtype=jnp.float32)
    params = [init_block_params(k, F, S, T, E) for k in jax.random.split(kp, num_blocks)]

    # batch_shards=2 exercises the multi-shard path (and feeds both v7x TensorCores); on
    # single-core v5e/v6e it is just one extra cheap grid step since weights stay resident.
    out = jax.block_until_ready(mixer_pallas(x, s, params, batch_shards=2))

    ref = x
    for p in params:                  # Mixer.forward: loop over mixer blocks
        ref = mixer_block_ref(ref, s, p)

    np.testing.assert_allclose(np.asarray(out), np.asarray(ref), rtol=2e-3, atol=2e-3)
    print("KERNEL_OK")
</pallas_src>

<mosaic_0001>
module attributes {stable_mosaic.version = 11 : i64} {
  func.func @mixer_kernel(%arg0: i32, %arg1: memref<8x16xf32, #tpu.memory_space<vmem>>, %arg2: memref<8x4xf32, #tpu.memory_space<vmem>>, %arg3: memref<2x8x8xf32, #tpu.memory_space<vmem>>, %arg4: memref<2x4x16xf32, #tpu.memory_space<vmem>>, %arg5: memref<2x8x8xf32, #tpu.memory_space<vmem>>, %arg6: memref<2x24x32xf32, #tpu.memory_space<vmem>>, %arg7: memref<2x16x16xf32, #tpu.memory_space<vmem>>, %arg8: memref<2x16x16xf32, #tpu.memory_space<vmem>>, %arg9: memref<2x8x3xf32, #tpu.memory_space<vmem>>, %arg10: memref<2x8x32xf32, #tpu.memory_space<vmem>>, %arg11: memref<8x16xf32, #tpu.memory_space<vmem>>) attributes {dimension_semantics = [#tpu.dimension_semantics<parallel>], iteration_bounds = array<i64: 2>, scalar_prefetch = 0 : i64, scratch_operands = 0 : i64, tpu.core_type = #tpu.core_type<tc>, window_params = [{transform_indices = @transform_0, window_bounds = array<i64: 8, 16>}, {transform_indices = @transform_1, window_bounds = array<i64: 8, 4>}, {pipeline_mode = #tpu.pipeline_mode<synchronous>, transform_indices = @transform_2, window_bounds = array<i64: 2, 8, 8>}, {pipeline_mode = #tpu.pipeline_mode<synchronous>, transform_indices = @transform_3, window_bounds = array<i64: 2, 4, 16>}, {pipeline_mode = #tpu.pipeline_mode<synchronous>, transform_indices = @transform_4, window_bounds = array<i64: 2, 8, 8>}, {pipeline_mode = #tpu.pipeline_mode<synchronous>, transform_indices = @transform_5, window_bounds = array<i64: 2, 24, 32>}, {pipeline_mode = #tpu.pipeline_mode<synchronous>, transform_indices = @transform_6, window_bounds = array<i64: 2, 16, 16>}, {pipeline_mode = #tpu.pipeline_mode<synchronous>, transform_indices = @transform_7, window_bounds = array<i64: 2, 16, 16>}, {pipeline_mode = #tpu.pipeline_mode<synchronous>, transform_indices = @transform_8, window_bounds = array<i64: 2, 8, 3>}, {pipeline_mode = #tpu.pipeline_mode<synchronous>, transform_indices = @transform_9, window_bounds = array<i64: 2, 8, 32>}, {transform_indices = @transform_10, window_bounds = array<i64: 8, 16>}]} {
    %c0 = arith.constant 0 : index
    %c0_0 = arith.constant 0 : index
    %0 = vector.load %arg1[%c0, %c0_0] : memref<8x16xf32, #tpu.memory_space<vmem>>, vector<8x16xf32>
    %c0_1 = arith.constant 0 : index
    %c0_2 = arith.constant 0 : index
    %1 = vector.load %arg2[%c0_1, %c0_2] : memref<8x4xf32, #tpu.memory_space<vmem>>, vector<8x4xf32>
    %c0_3 = arith.constant 0 : index
    %c0_4 = arith.constant 0 : index
    %c0_5 = arith.constant 0 : index
    %2 = vector.load %arg9[%c0_3, %c0_4, %c0_5] : memref<2x8x3xf32, #tpu.memory_space<vmem>>, vector<1x8x1xf32>
    %3 = vector.shape_cast %2 : vector<1x8x1xf32> to vector<8x1xf32>
    %c0_6 = arith.constant 0 : index
    %c0_7 = arith.constant 0 : index
    %c1 = arith.constant 1 : index
    %4 = vector.load %arg9[%c0_6, %c0_7, %c1] : memref<2x8x3xf32, #tpu.memory_space<vmem>>, vector<1x8x1xf32>
    %5 = vector.shape_cast %4 : vector<1x8x1xf32> to vector<8x1xf32>
    %c0_8 = arith.constant 0 : index
    %c0_9 = arith.constant 0 : index
    %c2 = arith.constant 2 : index
    %6 = vector.load %arg9[%c0_8, %c0_9, %c2] : memref<2x8x3xf32, #tpu.memory_space<vmem>>, vector<1x8x1xf32>
    %7 = vector.shape_cast %6 : vector<1x8x1xf32> to vector<8x1xf32>
    %c0_10 = arith.constant 0 : index
    %c0_11 = arith.constant 0 : index
    %c0_12 = arith.constant 0 : index
    %8 = vector.load %arg10[%c0_10, %c0_11, %c0_12] : memref<2x8x32xf32, #tpu.memory_space<vmem>>, vector<1x1x16xf32>
    %9 = vector.shape_cast %8 : vector<1x1x16xf32> to vector<1x16xf32>
    %c0_13 = arith.constant 0 : index
    %c1_14 = arith.constant 1 : index
    %c0_15 = arith.constant 0 : index
    %10 = vector.load %arg10[%c0_13, %c1_14, %c0_15] : memref<2x8x32xf32, #tpu.memory_space<vmem>>, vector<1x1x8xf32>
    %11 = vector.shape_cast %10 : vector<1x1x8xf32> to vector<1x8xf32>
    %c0_16 = arith.constant 0 : index
    %c2_17 = arith.constant 2 : index
    %c0_18 = arith.constant 0 : index
    %12 = vector.load %arg10[%c0_16, %c2_17, %c0_18] : memref<2x8x32xf32, #tpu.memory_space<vmem>>, vector<1x1x8xf32>
    %13 = vector.shape_cast %12 : vector<1x1x8xf32> to vector<1x8xf32>
    %c0_19 = arith.constant 0 : index
    %c3 = arith.constant 3 : index
    %c0_20 = arith.constant 0 : index
    %14 = vector.load %arg10[%c0_19, %c3, %c0_20] : memref<2x8x32xf32, #tpu.memory_space<vmem>>, vector<1x1x32xf32>
    %15 = vector.shape_cast %14 : vector<1x1x32xf32> to vector<1x32xf32>
    %c0_21 = arith.constant 0 : index
    %c4 = arith.constant 4 : index
    %c0_22 = arith.constant 0 : index
    %16 = vector.load %arg10[%c0_21, %c4, %c0_22] : memref<2x8x32xf32, #tpu.memory_space<vmem>>, vector<1x1x16xf32>
    %17 = vector.shape_cast %16 : vector<1x1x16xf32> to vector<1x16xf32>
    %c0_23 = arith.constant 0 : index
    %c5 = arith.constant 5 : index
    %c0_24 = arith.constant 0 : index
    %18 = vector.load %arg10[%c0_23, %c5, %c0_24] : memref<2x8x32xf32, #tpu.memory_space<vmem>>, vector<1x1x16xf32>
    %19 = vector.shape_cast %18 : vector<1x1x16xf32> to vector<1x16xf32>
    %c0_25 = arith.constant 0 : index
    %c6 = arith.constant 6 : index
    %c0_26 = arith.constant 0 : index
    %20 = vector.load %arg10[%c0_25, %c6, %c0_26] : memref<2x8x32xf32, #tpu.memory_space<vmem>>, vector<1x1x16xf32>
    %21 = vector.shape_cast %20 : vector<1x1x16xf32> to vector<1x16xf32>
    %c0_27 = arith.constant 0 : index
    %c0_28 = arith.constant 0 : index
    %c0_29 = arith.constant 0 : index
    %22 = vector.load %arg3[%c0_27, %c0_28, %c0_29] : memref<2x8x8xf32, #tpu.memory_space<vmem>>, vector<1x8x8xf32>
    %23 = vector.shape_cast %22 : vector<1x8x8xf32> to vector<8x8xf32>
    %cst = arith.constant dense<0.000000e+00> : vector<8x16xf32>
    %24 = tpu.matmul %23, %0, %cst {dimension_numbers = #tpu.dot_dimension_numbers<[1], [0], [0], [1], [0, 0, 1, 1], [], []>} : vector<8x8xf32>, vector<8x16xf32>, vector<8x16xf32> -> vector<8x16xf32>
    %25 = vector.broadcast %3 : vector<8x1xf32> to vector<8x16xf32>
    %26 = arith.addf %24, %25 : vector<8x16xf32>
    %cst_30 = arith.constant 0.000000e+00 : f32
    %27 = vector.broadcast %cst_30 : f32 to vector<8x16xf32>
    %28 = arith.maximumf %26, %27 : vector<8x16xf32>
    %29 = arith.addf %0, %28 : vector<8x16xf32>
    %30 = vector.broadcast %5 : vector<8x1xf32> to vector<8x16xf32>
    %31 = arith.mulf %29, %30 : vector<8x16xf32>
    %32 = vector.broadcast %7 : vector<8x1xf32> to vector<8x16xf32>
    %33 = arith.addf %31, %32 : vector<8x16xf32>
    %c0_31 = arith.constant 0 : index
    %c0_32 = arith.constant 0 : index
    %c0_33 = arith.constant 0 : index
    %34 = vector.load %arg4[%c0_31, %c0_32, %c0_33] : memref<2x4x16xf32, #tpu.memory_space<vmem>>, vector<1x4x16xf32>
    %35 = vector.shape_cast %34 : vector<1x4x16xf32> to vector<4x16xf32>
    %cst_34 = arith.constant dense<0.000000e+00> : vector<8x16xf32>
    %36 = tpu.matmul %1, %35, %cst_34 {dimension_numbers = #tpu.dot_dimension_numbers<[1], [0], [0], [1], [0, 0, 1, 1], [], []>} : vector<8x4xf32>, vector<4x16xf32>, vector<8x16xf32> -> vector<8x16xf32>
    %37 = vector.broadcast %9 : vector<1x16xf32> to vector<8x16xf32>
    %38 = arith.addf %36, %37 : vector<8x16xf32>
    %39 = vector.extract_strided_slice %38 {offsets = [0, 0], sizes = [8, 8], strides = [1, 1]} : vector<8x16xf32> to vector<8x8xf32>
    %cst_35 = arith.constant 0.000000e+00 : f32
    %40 = vector.broadcast %cst_35 : f32 to vector<8x8xf32>
    %41 = arith.maximumf %39, %40 : vector<8x8xf32>
    %c0_36 = arith.constant 0 : index
    %c0_37 = arith.constant 0 : index
    %c0_38 = arith.constant 0 : index
    %42 = vector.load %arg5[%c0_36, %c0_37, %c0_38] : memref<2x8x8xf32, #tpu.memory_space<vmem>>, vector<1x8x8xf32>
    %43 = vector.shape_cast %42 : vector<1x8x8xf32> to vector<8x8xf32>
    %cst_39 = arith.constant dense<0.000000e+00> : vector<8x8xf32>
    %44 = tpu.matmul %41, %43, %cst_39 {dimension_numbers = #tpu.dot_dimension_numbers<[1], [0], [0], [1], [0, 0, 1, 1], [], []>} : vector<8x8xf32>, vector<8x8xf32>, vector<8x8xf32> -> vector<8x8xf32>
    %45 = vector.extract_strided_slice %38 {offsets = [0, 8], sizes = [8, 8], strides = [1, 1]} : vector<8x16xf32> to vector<8x8xf32>
    %46 = arith.addf %45, %44 : vector<8x8xf32>
    %47 = vector.broadcast %11 : vector<1x8xf32> to vector<8x8xf32>
    %48 = arith.mulf %46, %47 : vector<8x8xf32>
    %49 = vector.broadcast %13 : vector<1x8xf32> to vector<8x8xf32>
    %50 = arith.addf %48, %49 : vector<8x8xf32>
    %c0_40 = arith.constant 0 : index
    %c0_41 = arith.constant 0 : index
    %c0_42 = arith.constant 0 : index
    %51 = vector.load %arg6[%c0_40, %c0_41, %c0_42] : memref<2x24x32xf32, #tpu.memory_space<vmem>>, vector<1x16x32xf32>
    %52 = vector.shape_cast %51 : vector<1x16x32xf32> to vector<16x32xf32>
    %cst_43 = arith.constant dense<0.000000e+00> : vector<8x32xf32>
    %53 = tpu.matmul %33, %52, %cst_43 {dimension_numbers = #tpu.dot_dimension_numbers<[1], [0], [0], [1], [0, 0, 1, 1], [], []>} : vector<8x16xf32>, vector<16x32xf32>, vector<8x32xf32> -> vector<8x32xf32>
    %c0_44 = arith.constant 0 : index
    %c16 = arith.constant 16 : index
    %c0_45 = arith.constant 0 : index
    %54 = vector.load %arg6[%c0_44, %c16, %c0_45] : memref<2x24x32xf32, #tpu.memory_space<vmem>>, vector<1x8x32xf32>
    %55 = vector.shape_cast %54 : vector<1x8x32xf32> to vector<8x32xf32>
    %cst_46 = arith.constant dense<0.000000e+00> : vector<8x32xf32>
    %56 = tpu.matmul %50, %55, %cst_46 {dimension_numbers = #tpu.dot_dimension_numbers<[1], [0], [0], [1], [0, 0, 1, 1], [], []>} : vector<8x8xf32>, vector<8x32xf32>, vector<8x32xf32> -> vector<8x32xf32>
    %57 = arith.addf %53, %56 : vector<8x32xf32>
    %58 = vector.broadcast %15 : vector<1x32xf32> to vector<8x32xf32>
    %59 = arith.addf %57, %58 : vector<8x32xf32>
    %60 = vector.extract_strided_slice %59 {offsets = [0, 0], sizes = [8, 16], strides = [1, 1]} : vector<8x32xf32> to vector<8x16xf32>
    %cst_47 = arith.constant 0.000000e+00 : f32
    %61 = vector.broadcast %cst_47 : f32 to vector<8x16xf32>
    %62 = arith.maximumf %60, %61 : vector<8x16xf32>
    %c0_48 = arith.constant 0 : index
    %c0_49 = arith.constant 0 : index
    %c0_50 = arith.constant 0 : index
    %63 = vector.load %arg7[%c0_48, %c0_49, %c0_50] : memref<2x16x16xf32, #tpu.memory_space<vmem>>, vector<1x16x16xf32>
    %64 = vector.shape_cast %63 : vector<1x16x16xf32> to vector<16x16xf32>
    %cst_51 = arith.constant dense<0.000000e+00> : vector<8x16xf32>
    %65 = tpu.matmul %62, %64, %cst_51 {dimension_numbers = #tpu.dot_dimension_numbers<[1], [0], [0], [1], [0, 0, 1, 1], [], []>} : vector<8x16xf32>, vector<16x16xf32>, vector<8x16xf32> -> vector<8x16xf32>
    %66 = vector.extract_strided_slice %59 {offsets = [0, 16], sizes = [8, 16], strides = [1, 1]} : vector<8x32xf32> to vector<8x16xf32>
    %67 = arith.addf %66, %65 : vector<8x16xf32>
    %68 = vector.broadcast %17 : vector<1x16xf32> to vector<8x16xf32>
    %69 = arith.mulf %67, %68 : vector<8x16xf32>
    %70 = vector.broadcast %19 : vector<1x16xf32> to vector<8x16xf32>
    %71 = arith.addf %69, %70 : vector<8x16xf32>
    %c0_52 = arith.constant 0 : index
    %c0_53 = arith.constant 0 : index
    %c0_54 = arith.constant 0 : index
    %72 = vector.load %arg8[%c0_52, %c0_53, %c0_54] : memref<2x16x16xf32, #tpu.memory_space<vmem>>, vector<1x16x16xf32>
    %73 = vector.shape_cast %72 : vector<1x16x16xf32> to vector<16x16xf32>
    %cst_55 = arith.constant dense<0.000000e+00> : vector<8x16xf32>
    %74 = tpu.matmul %71, %73, %cst_55 {dimension_numbers = #tpu.dot_dimension_numbers<[1], [0], [0], [1], [0, 0, 1, 1], [], []>} : vector<8x16xf32>, vector<16x16xf32>, vector<8x16xf32> -> vector<8x16xf32>
    %75 = vector.broadcast %21 : vector<1x16xf32> to vector<8x16xf32>
    %76 = arith.addf %74, %75 : vector<8x16xf32>
    %c1_56 = arith.constant 1 : index
    %c0_57 = arith.constant 0 : index
    %c0_58 = arith.constant 0 : index
    %77 = vector.load %arg9[%c1_56, %c0_57, %c0_58] : memref<2x8x3xf32, #tpu.memory_space<vmem>>, vector<1x8x1xf32>
    %78 = vector.shape_cast %77 : vector<1x8x1xf32> to vector<8x1xf32>
    %c1_59 = arith.constant 1 : index
    %c0_60 = arith.constant 0 : index
    %c1_61 = arith.constant 1 : index
    %79 = vector.load %arg9[%c1_59, %c0_60, %c1_61] : memref<2x8x3xf32, #tpu.memory_space<vmem>>, vector<1x8x1xf32>
    %80 = vector.shape_cast %79 : vector<1x8x1xf32> to vector<8x1xf32>
    %c1_62 = arith.constant 1 : index
    %c0_63 = arith.constant 0 : index
    %c2_64 = arith.constant 2 : index
    %81 = vector.load %arg9[%c1_62, %c0_63, %c2_64] : memref<2x8x3xf32, #tpu.memory_space<vmem>>, vector<1x8x1xf32>
    %82 = vector.shape_cast %81 : vector<1x8x1xf32> to vector<8x1xf32>
    %c1_65 = arith.constant 1 : index
    %c0_66 = arith.constant 0 : index
    %c0_67 = arith.constant 0 : index
    %83 = vector.load %arg10[%c1_65, %c0_66, %c0_67] : memref<2x8x32xf32, #tpu.memory_space<vmem>>, vector<1x1x16xf32>
    %84 = vector.shape_cast %83 : vector<1x1x16xf32> to vector<1x16xf32>
    %c1_68 = arith.constant 1 : index
    %c1_69 = arith.constant 1 : index
    %c0_70 = arith.constant 0 : index
    %85 = vector.load %arg10[%c1_68, %c1_69, %c0_70] : memref<2x8x32xf32, #tpu.memory_space<vmem>>, vector<1x1x8xf32>
    %86 = vector.shape_cast %85 : vector<1x1x8xf32> to vector<1x8xf32>
    %c1_71 = arith.constant 1 : index
    %c2_72 = arith.constant 2 : index
    %c0_73 = arith.constant 0 : index
    %87 = vector.load %arg10[%c1_71, %c2_72, %c0_73] : memref<2x8x32xf32, #tpu.memory_space<vmem>>, vector<1x1x8xf32>
    %88 = vector.shape_cast %87 : vector<1x1x8xf32> to vector<1x8xf32>
    %c1_74 = arith.constant 1 : index
    %c3_75 = arith.constant 3 : index
    %c0_76 = arith.constant 0 : index
    %89 = vector.load %arg10[%c1_74, %c3_75, %c0_76] : memref<2x8x32xf32, #tpu.memory_space<vmem>>, vector<1x1x32xf32>
    %90 = vector.shape_cast %89 : vector<1x1x32xf32> to vector<1x32xf32>
    %c1_77 = arith.constant 1 : index
    %c4_78 = arith.constant 4 : index
    %c0_79 = arith.constant 0 : index
    %91 = vector.load %arg10[%c1_77, %c4_78, %c0_79] : memref<2x8x32xf32, #tpu.memory_space<vmem>>, vector<1x1x16xf32>
    %92 = vector.shape_cast %91 : vector<1x1x16xf32> to vector<1x16xf32>
    %c1_80 = arith.constant 1 : index
    %c5_81 = arith.constant 5 : index
    %c0_82 = arith.constant 0 : index
    %93 = vector.load %arg10[%c1_80, %c5_81, %c0_82] : memref<2x8x32xf32, #tpu.memory_space<vmem>>, vector<1x1x16xf32>
    %94 = vector.shape_cast %93 : vector<1x1x16xf32> to vector<1x16xf32>
    %c1_83 = arith.constant 1 : index
    %c6_84 = arith.constant 6 : index
    %c0_85 = arith.constant 0 : index
    %95 = vector.load %arg10[%c1_83, %c6_84, %c0_85] : memref<2x8x32xf32, #tpu.memory_space<vmem>>, vector<1x1x16xf32>
    %96 = vector.shape_cast %95 : vector<1x1x16xf32> to vector<1x16xf32>
    %c1_86 = arith.constant 1 : index
    %c0_87 = arith.constant 0 : index
    %c0_88 = arith.constant 0 : index
    %97 = vector.load %arg3[%c1_86, %c0_87, %c0_88] : memref<2x8x8xf32, #tpu.memory_space<vmem>>, vector<1x8x8xf32>
    %98 = vector.shape_cast %97 : vector<1x8x8xf32> to vector<8x8xf32>
    %cst_89 = arith.constant dense<0.000000e+00> : vector<8x16xf32>
    %99 = tpu.matmul %98, %76, %cst_89 {dimension_numbers = #tpu.dot_dimension_numbers<[1], [0], [0], [1], [0, 0, 1, 1], [], []>} : vector<8x8xf32>, vector<8x16xf32>, vector<8x16xf32> -> vector<8x16xf32>
    %100 = vector.broadcast %78 : vector<8x1xf32> to vector<8x16xf32>
    %101 = arith.addf %99, %100 : vector<8x16xf32>
    %cst_90 = arith.constant 0.000000e+00 : f32
    %102 = vector.broadcast %cst_90 : f32 to vector<8x16xf32>
    %103 = arith.maximumf %101, %102 : vector<8x16xf32>
    %104 = arith.addf %76, %103 : vector<8x16xf32>
    %105 = vector.broadcast %80 : vector<8x1xf32> to vector<8x16xf32>
    %106 = arith.mulf %104, %105 : vector<8x16xf32>
    %107 = vector.broadcast %82 : vector<8x1xf32> to vector<8x16xf32>
    %108 = arith.addf %106, %107 : vector<8x16xf32>
    %c1_91 = arith.constant 1 : index
    %c0_92 = arith.constant 0 : index
    %c0_93 = arith.constant 0 : index
    %109 = vector.load %arg4[%c1_91, %c0_92, %c0_93] : memref<2x4x16xf32, #tpu.memory_space<vmem>>, vector<1x4x16xf32>
    %110 = vector.shape_cast %109 : vector<1x4x16xf32> to vector<4x16xf32>
    %cst_94 = arith.constant dense<0.000000e+00> : vector<8x16xf32>
    %111 = tpu.matmul %1, %110, %cst_94 {dimension_numbers = #tpu.dot_dimension_numbers<[1], [0], [0], [1], [0, 0, 1, 1], [], []>} : vector<8x4xf32>, vector<4x16xf32>, vector<8x16xf32> -> vector<8x16xf32>
    %112 = vector.broadcast %84 : vector<1x16xf32> to vector<8x16xf32>
    %113 = arith.addf %111, %112 : vector<8x16xf32>
    %114 = vector.extract_strided_slice %113 {offsets = [0, 0], sizes = [8, 8], strides = [1, 1]} : vector<8x16xf32> to vector<8x8xf32>
    %cst_95 = arith.constant 0.000000e+00 : f32
    %115 = vector.broadcast %cst_95 : f32 to vector<8x8xf32>
    %116 = arith.maximumf %114, %115 : vector<8x8xf32>
    %c1_96 = arith.constant 1 : index
    %c0_97 = arith.constant 0 : index
    %c0_98 = arith.constant 0 : index
    %117 = vector.load %arg5[%c1_96, %c0_97, %c0_98] : memref<2x8x8xf32, #tpu.memory_space<vmem>>, vector<1x8x8xf32>
    %118 = vector.shape_cast %117 : vector<1x8x8xf32> to vector<8x8xf32>
    %cst_99 = arith.constant dense<0.000000e+00> : vector<8x8xf32>
    %119 = tpu.matmul %116, %118, %cst_99 {dimension_numbers = #tpu.dot_dimension_numbers<[1], [0], [0], [1], [0, 0, 1, 1], [], []>} : vector<8x8xf32>, vector<8x8xf32>, vector<8x8xf32> -> vector<8x8xf32>
    %120 = vector.extract_strided_slice %113 {offsets = [0, 8], sizes = [8, 8], strides = [1, 1]} : vector<8x16xf32> to vector<8x8xf32>
    %121 = arith.addf %120, %119 : vector<8x8xf32>
    %122 = vector.broadcast %86 : vector<1x8xf32> to vector<8x8xf32>
    %123 = arith.mulf %121, %122 : vector<8x8xf32>
    %124 = vector.broadcast %88 : vector<1x8xf32> to vector<8x8xf32>
    %125 = arith.addf %123, %124 : vector<8x8xf32>
    %c1_100 = arith.constant 1 : index
    %c0_101 = arith.constant 0 : index
    %c0_102 = arith.constant 0 : index
    %126 = vector.load %arg6[%c1_100, %c0_101, %c0_102] : memref<2x24x32xf32, #tpu.memory_space<vmem>>, vector<1x16x32xf32>
    %127 = vector.shape_cast %126 : vector<1x16x32xf32> to vector<16x32xf32>
    %cst_103 = arith.constant dense<0.000000e+00> : vector<8x32xf32>
    %128 = tpu.matmul %108, %127, %cst_103 {dimension_numbers = #tpu.dot_dimension_numbers<[1], [0], [0], [1], [0, 0, 1, 1], [], []>} : vector<8x16xf32>, vector<16x32xf32>, vector<8x32xf32> -> vector<8x32xf32>
    %c1_104 = arith.constant 1 : index
    %c16_105 = arith.constant 16 : index
    %c0_106 = arith.constant 0 : index
    %129 = vector.load %arg6[%c1_104, %c16_105, %c0_106] : memref<2x24x32xf32, #tpu.memory_space<vmem>>, vector<1x8x32xf32>
    %130 = vector.shape_cast %129 : vector<1x8x32xf32> to vector<8x32xf32>
    %cst_107 = arith.constant dense<0.000000e+00> : vector<8x32xf32>
    %131 = tpu.matmul %125, %130, %cst_107 {dimension_numbers = #tpu.dot_dimension_numbers<[1], [0], [0], [1], [0, 0, 1, 1], [], []>} : vector<8x8xf32>, vector<8x32xf32>, vector<8x32xf32> -> vector<8x32xf32>
    %132 = arith.addf %128, %131 : vector<8x32xf32>
    %133 = vector.broadcast %90 : vector<1x32xf32> to vector<8x32xf32>
    %134 = arith.addf %132, %133 : vector<8x32xf32>
    %135 = vector.extract_strided_slice %134 {offsets = [0, 0], sizes = [8, 16], strides = [1, 1]} : vector<8x32xf32> to vector<8x16xf32>
    %cst_108 = arith.constant 0.000000e+00 : f32
    %136 = vector.broadcast %cst_108 : f32 to vector<8x16xf32>
    %137 = arith.maximumf %135, %136 : vector<8x16xf32>
    %c1_109 = arith.constant 1 : index
    %c0_110 = arith.constant 0 : index
    %c0_111 = arith.constant 0 : index
    %138 = vector.load %arg7[%c1_109, %c0_110, %c0_111] : memref<2x16x16xf32, #tpu.memory_space<vmem>>, vector<1x16x16xf32>
    %139 = vector.shape_cast %138 : vector<1x16x16xf32> to vector<16x16xf32>
    %cst_112 = arith.constant dense<0.000000e+00> : vector<8x16xf32>
    %140 = tpu.matmul %137, %139, %cst_112 {dimension_numbers = #tpu.dot_dimension_numbers<[1], [0], [0], [1], [0, 0, 1, 1], [], []>} : vector<8x16xf32>, vector<16x16xf32>, vector<8x16xf32> -> vector<8x16xf32>
    %141 = vector.extract_strided_slice %134 {offsets = [0, 16], sizes = [8, 16], strides = [1, 1]} : vector<8x32xf32> to vector<8x16xf32>
    %142 = arith.addf %141, %140 : vector<8x16xf32>
    %143 = vector.broadcast %92 : vector<1x16xf32> to vector<8x16xf32>
    %144 = arith.mulf %142, %143 : vector<8x16xf32>
    %145 = vector.broadcast %94 : vector<1x16xf32> to vector<8x16xf32>
    %146 = arith.addf %144, %145 : vector<8x16xf32>
    %c1_113 = arith.constant 1 : index
    %c0_114 = arith.constant 0 : index
    %c0_115 = arith.constant 0 : index
    %147 = vector.load %arg8[%c1_113, %c0_114, %c0_115] : memref<2x16x16xf32, #tpu.memory_space<vmem>>, vector<1x16x16xf32>
    %148 = vector.shape_cast %147 : vector<1x16x16xf32> to vector<16x16xf32>
    %cst_116 = arith.constant dense<0.000000e+00> : vector<8x16xf32>
    %149 = tpu.matmul %146, %148, %cst_116 {dimension_numbers = #tpu.dot_dimension_numbers<[1], [0], [0], [1], [0, 0, 1, 1], [], []>} : vector<8x16xf32>, vector<16x16xf32>, vector<8x16xf32> -> vector<8x16xf32>
    %150 = vector.broadcast %96 : vector<1x16xf32> to vector<8x16xf32>
    %151 = arith.addf %149, %150 : vector<8x16xf32>
    %c0_117 = arith.constant 0 : index
    %c0_118 = arith.constant 0 : index
    %152 = vector.load %arg11[%c0_117, %c0_118] : memref<8x16xf32, #tpu.memory_space<vmem>>, vector<8x16xf32>
    tpu.vector_store %arg11[%c0_117, %c0_118], %151 {strides = array<i32>} : memref<8x16xf32, #tpu.memory_space<vmem>>, vector<8x16xf32>,
    return
  }
  func.func @transform_0(%arg0: i32) -> (i32, i32) {
    %c0_i32 = arith.constant 0 : i32
    %c0_i32_0 = arith.constant 0 : i32
    return %arg0, %c0_i32 : i32, i32
  }
  func.func @transform_1(%arg0: i32) -> (i32, i32) {
    %c0_i32 = arith.constant 0 : i32
    %c0_i32_0 = arith.constant 0 : i32
    return %arg0, %c0_i32 : i32, i32
  }
  func.func @transform_2(%arg0: i32) -> (i32, i32, i32) {
    %c0_i32 = arith.constant 0 : i32
    %c0_i32_0 = arith.constant 0 : i32
    %c0_i32_1 = arith.constant 0 : i32
    %c0_i32_2 = arith.constant 0 : i32
    return %c0_i32, %c0_i32_0, %c0_i32_1 : i32, i32, i32
  }
  func.func @transform_3(%arg0: i32) -> (i32, i32, i32) {
    %c0_i32 = arith.constant 0 : i32
    %c0_i32_0 = arith.constant 0 : i32
    %c0_i32_1 = arith.constant 0 : i32
    %c0_i32_2 = arith.constant 0 : i32
    return %c0_i32, %c0_i32_0, %c0_i32_1 : i32, i32, i32
  }
  func.func @transform_4(%arg0: i32) -> (i32, i32, i32) {
    %c0_i32 = arith.constant 0 : i32
    %c0_i32_0 = arith.constant 0 : i32
    %c0_i32_1 = arith.constant 0 : i32
    %c0_i32_2 = arith.constant 0 : i32
    return %c0_i32, %c0_i32_0, %c0_i32_1 : i32, i32, i32
  }
  func.func @transform_5(%arg0: i32) -> (i32, i32, i32) {
    %c0_i32 = arith.constant 0 : i32
    %c0_i32_0 = arith.constant 0 : i32
    %c0_i32_1 = arith.constant 0 : i32
    %c0_i32_2 = arith.constant 0 : i32
    return %c0_i32, %c0_i32_0, %c0_i32_1 : i32, i32, i32
  }
  func.func @transform_6(%arg0: i32) -> (i32, i32, i32) {
    %c0_i32 = arith.constant 0 : i32
    %c0_i32_0 = arith.constant 0 : i32
    %c0_i32_1 = arith.constant 0 : i32
    %c0_i32_2 = arith.constant 0 : i32
    return %c0_i32, %c0_i32_0, %c0_i32_1 : i32, i32, i32
  }
  func.func @transform_7(%arg0: i32) -> (i32, i32, i32) {
    %c0_i32 = arith.constant 0 : i32
    %c0_i32_0 = arith.constant 0 : i32
    %c0_i32_1 = arith.constant 0 : i32
    %c0_i32_2 = arith.constant 0 : i32
    return %c0_i32, %c0_i32_0, %c0_i32_1 : i32, i32, i32
  }
  func.func @transform_8(%arg0: i32) -> (i32, i32, i32) {
    %c0_i32 = arith.constant 0 : i32
    %c0_i32_0 = arith.constant 0 : i32
    %c0_i32_1 = arith.constant 0 : i32
    %c0_i32_2 = arith.constant 0 : i32
    return %c0_i32, %c0_i32_0, %c0_i32_1 : i32, i32, i32
  }
  func.func @transform_9(%arg0: i32) -> (i32, i32, i32) {
    %c0_i32 = arith.constant 0 : i32
    %c0_i32_0 = arith.constant 0 : i32
    %c0_i32_1 = arith.constant 0 : i32
    %c0_i32_2 = arith.constant 0 : i32
    return %c0_i32, %c0_i32_0, %c0_i32_1 : i32, i32, i32
  }
  func.func @transform_10(%arg0: i32) -> (i32, i32) {
    %c0_i32 = arith.constant 0 : i32
    %c0_i32_0 = arith.constant 0 : i32
    return %arg0, %c0_i32 : i32, i32
  }
}

</mosaic_0001>

<llo_original>
// kernel: tpu_custom_call.1
$region0: #{tpu_custom_call.1}
  #allocation0 [shape = 'u32[]', space=smem, size = 0x4, offset = 0x4, fixed_abs, tag = 'smem constant byte address 0x4 - core index']
  #allocation1 [shape = 'u32[72,128]{1,0:T(1,128)}', space=vmem, size = 0x9000, scoped, tag = 'internal scratch']
  %s0 = inlined_call_operand.hbm [shape: f32[16,16], index: 0, kind: input, shape index: {}]
  %s1 = inlined_call_operand.vmem [shape: f32[16,4], index: 1, kind: input, shape index: {}]
  %s2 = inlined_call_operand.hbm [shape: f32[2,8,8], index: 2, kind: input, shape index: {}]
  %s3 = inlined_call_operand.hbm [shape: f32[2,4,16], index: 3, kind: input, shape index: {}]
  %s4 = inlined_call_operand.hbm [shape: f32[2,8,8], index: 4, kind: input, shape index: {}]
  %s5 = inlined_call_operand.hbm [shape: f32[2,24,32], index: 5, kind: input, shape index: {}]
  %s6 = inlined_call_operand.vmem [shape: f32[2,16,16], index: 6, kind: input, shape index: {}]
  %s7 = inlined_call_operand.hbm [shape: f32[2,16,16], index: 7, kind: input, shape index: {}]
  %s8 = inlined_call_operand.vmem [shape: f32[2,8,3], index: 8, kind: input, shape index: {}]
  %s9 = inlined_call_operand.hbm [shape: f32[2,8,32], index: 9, kind: input, shape index: {}]
  %s10 = inlined_call_operand.hbm [shape: f32[16,16], index: 10, kind: output, shape index: {}]
  %s11 = sld [smem:[#allocation0]]
  $region101: #{tpu_custom_call.1} parent=0
    _
  %s13 = ssub.s32 1, %s11
  %s14 = scalar_select 0, %s13, %s11
  $region1: #{tpu_custom_call.1} parent=0
    #allocation2 [shape = 'u8[8192]{0}', space=vmem, size = 0x2000, scoped, tag = 'input window, operand 0']
    #allocation3 [shape = 's32[2]{0}', space=sflag, size = 0x8, scoped, tag = 'scoped memory for tpu_custom_call.1']
    #allocation4 [shape = 's32[2]{0}', space=sflag, size = 0x8, scoped, tag = 'scoped memory for tpu_custom_call.1']
    #allocation5 [shape = 'u8[8192]{0}', space=vmem, size = 0x2000, scoped, tag = 'input window, operand 2, single buffered']
    #allocation6 [shape = 's32[1]{0}', space=sflag, size = 0x4, scoped, tag = 'scoped memory for tpu_custom_call.1']
    #allocation7 [shape = 'u8[4096]{0}', space=vmem, size = 0x1000, scoped, tag = 'input window, operand 3, single buffered']
    #allocation8 [shape = 'u8[8192]{0}', space=vmem, size = 0x2000, scoped, tag = 'input window, operand 4, single buffered']
    #allocation9 [shape = 's32[1]{0}', space=sflag, size = 0x4, scoped, tag = 'scoped memory for tpu_custom_call.1']
    #allocation10 [shape = 'u8[24576]{0}', space=vmem, size = 0x6000, scoped, tag = 'input window, operand 5, single buffered']
    #allocation11 [shape = 'u8[16384]{0}', space=vmem, size = 0x4000, scoped, tag = 'input window, operand 7, single buffered']
    #allocation12 [shape = 's32[1]{0}', space=sflag, size = 0x4, scoped, tag = 'scoped memory for tpu_custom_call.1']
    #allocation13 [shape = 'u8[8192]{0}', space=vmem, size = 0x2000, scoped, tag = 'input window, operand 9, single buffered']
    #allocation14 [shape = 'u8[8192]{0}', space=vmem, size = 0x2000, scoped, tag = 'output window, operand 0']
    %15 = vsyncpa [#allocation3], 0
    %s16 = scalar_lea.sflag [#allocation3], 1
    %17 = vsyncpa %s16, 0
    %18 = vsyncpa [#allocation6], 0
    %19 = vsyncpa [#allocation9], 0
    %20 = vsyncpa [#allocation12], 0
    %21 = vsyncpa [#allocation4], 0
    %s22 = scalar_lea.sflag [#allocation4], 1
    %23 = vsyncpa %s22, 0
    loop: start=0, step=1, limit=4
    $region2: #{tpu_custom_call.1} parent=1 // loop_pre_header
      _
    $region3: #{tpu_custom_call.1} parent=1 // loop_header
      %s25 = sphi 0, %s29
      %p26 = scmp.ge.s32.totalorder %s25, 4
      %s35 = sphi 0, %s37
      %s38 = sphi 0, %s35
      %s39 = sphi 0, %s38
      %s55 = sphi 0, %s39
      %s61 = sphi 0, %s63
      %s64 = sphi 0, %s61
      %s65 = sphi 0, %s64
      %s81 = sphi 0, %s65
      %s85 = sphi 0, %s85
      %s87 = sphi 0, %s85
      %s88 = sphi 0, %s87
      %s102 = sphi 0, %s88
      %s106 = sphi 0, %s106
      %s108 = sphi 0, %s106
      %s109 = sphi 0, %s108
      %s123 = sphi 0, %s109
      %s127 = sphi 0, %s127
      %s129 = sphi 0, %s127
      %s130 = sphi 0, %s129
      %s144 = sphi 0, %s130
      %s148 = sphi 0, %s148
      %s150 = sphi 0, %s148
      %s151 = sphi 0, %s150
      %s165 = sphi 0, %s151
      %s169 = sphi 0, %s169
      %s171 = sphi 0, %s169
      %s172 = sphi 0, %s171
      %s186 = sphi 0, %s172
      %s190 = sphi 0, %s190
      %s192 = sphi 0, %s190
      %s193 = sphi 0, %s192
      %s207 = sphi 0, %s193
      %s211 = sphi 0, %s211
      %s213 = sphi 0, %s211
      %s214 = sphi 0, %s213
      %s228 = sphi 0, %s214
      %s232 = sphi 0, %s232
      %s234 = sphi 0, %s232
      %s235 = sphi 0, %s234
      %s249 = sphi 0, %s235
      %s255 = sphi 0, %s257
      %s258 = sphi 0, %s255
      %s259 = sphi 0, %s258
      %s275 = sphi 0, %s259
    $region4: #{tpu_custom_call.1} parent=1 // loop_header_branch
      %28 = sbr.rel (%p26) target = $region8
    $region5: #{tpu_custom_call.1} parent=1 // loop_body
      %s30 = ssub.s32 %s25, 1
      %s31 = ssub.s32 %s25, 2
      %s32 = sadd.s32 %s25, 1
      %s33 = ssub.s32 %s25, %s32
      %p34 = scmp.eq.s32.totalorder %s33, 0
      %s36 = sadd.s32 %s35, 1
      %s37 = scalar_select %p34, %s35, %s36
      %p40 = pneg %p34
      %p41 = scmp.eq.s32.totalorder %s25, 1
      %p42 = por %p40, %p41
      %p43 = scmp.ne.s32.totalorder %s35, %s38
      %p44 = scmp.eq.s32.totalorder %s25, 0
      %p45 = por %p43, %p44
      %p46 = scmp.ne.s32.totalorder %s35, %s38
      %p47 = scmp.eq.s32.totalorder %s30, 1
      %p48 = por %p46, %p47
      %p49 = scmp.ne.s32.totalorder %s38, %s39
      %p50 = scmp.eq.s32.totalorder %s30, 0
      %p51 = por %p49, %p50
      %p52 = scmp.ne.s32.totalorder %s38, %s39
      %p53 = scmp.eq.s32.totalorder %s31, 1
      %p54 = por %p52, %p53
      %p56 = scmp.ne.s32.totalorder %s39, %s55
      %p57 = scmp.eq.s32.totalorder %s31, 0
      %p58 = por %p56, %p57
      %s59 = ssub.s32 %s25, %s32
      %p60 = scmp.eq.s32.totalorder %s59, 0
      %s62 = sadd.s32 %s61, 1
      %s63 = scalar_select %p60, %s61, %s62
      %p66 = pneg %p60
      %p67 = scmp.eq.s32.totalorder %s25, 1
      %p68 = por %p66, %p67
      %p69 = scmp.ne.s32.totalorder %s61, %s64
      %p70 = scmp.eq.s32.totalorder %s25, 0
      %p71 = por %p69, %p70
      %p72 = scmp.ne.s32.totalorder %s61, %s64
      %p73 = scmp.eq.s32.totalorder %s30, 1
      %p74 = por %p72, %p73
      %p75 = scmp.ne.s32.totalorder %s64, %s65
      %p76 = scmp.eq.s32.totalorder %s30, 0
      %p77 = por %p75, %p76
      %p78 = scmp.ne.s32.totalorder %s64, %s65
      %p79 = scmp.eq.s32.totalorder %s31, 1
      %p80 = por %p78, %p79
      %p82 = scmp.ne.s32.totalorder %s65, %s81
      %p83 = scmp.eq.s32.totalorder %s31, 0
      %p84 = por %p82, %p83
      %s86 = sadd.s32 %s85, 1
      %p89 = scmp.eq.s32.totalorder %s25, 1
      %p90 = scmp.ne.s32.totalorder %s85, %s87
      %p91 = scmp.eq.s32.totalorder %s25, 0
      %p92 = por %p90, %p91
      %p93 = scmp.ne.s32.totalorder %s85, %s87
      %p94 = scmp.eq.s32.totalorder %s30, 1
      %p95 = por %p93, %p94
      %p96 = scmp.ne.s32.totalorder %s87, %s88
      %p97 = scmp.eq.s32.totalorder %s30, 0
      %p98 = por %p96, %p97
      %p99 = scmp.ne.s32.totalorder %s87, %s88
      %p100 = scmp.eq.s32.totalorder %s31, 1
      %p101 = por %p99, %p100
      %p103 = scmp.ne.s32.totalorder %s88, %s102
      %p104 = scmp.eq.s32.totalorder %s31, 0
      %p105 = por %p103, %p104
      %s107 = sadd.s32 %s106, 1
      %p110 = scmp.eq.s32.totalorder %s25, 1
      %p111 = scmp.ne.s32.totalorder %s106, %s108
      %p112 = scmp.eq.s32.totalorder %s25, 0
      %p113 = por %p111, %p112
      %p114 = scmp.ne.s32.totalorder %s106, %s108
      %p115 = scmp.eq.s32.totalorder %s30, 1
      %p116 = por %p114, %p115
      %p117 = scmp.ne.s32.totalorder %s108, %s109
      %p118 = scmp.eq.s32.totalorder %s30, 0
      %p119 = por %p117, %p118
      %p120 = scmp.ne.s32.totalorder %s108, %s109
      %p121 = scmp.eq.s32.totalorder %s31, 1
      %p122 = por %p120, %p121
      %p124 = scmp.ne.s32.totalorder %s109, %s123
      %p125 = scmp.eq.s32.totalorder %s31, 0
      %p126 = por %p124, %p125
      %s128 = sadd.s32 %s127, 1
      %p131 = scmp.eq.s32.totalorder %s25, 1
      %p132 = scmp.ne.s32.totalorder %s127, %s129
      %p133 = scmp.eq.s32.totalorder %s25, 0
      %p134 = por %p132, %p133
      %p135 = scmp.ne.s32.totalorder %s127, %s129
      %p136 = scmp.eq.s32.totalorder %s30, 1
      %p137 = por %p135, %p136
      %p138 = scmp.ne.s32.totalorder %s129, %s130
      %p139 = scmp.eq.s32.totalorder %s30, 0
      %p140 = por %p138, %p139
      %p141 = scmp.ne.s32.totalorder %s129, %s130
      %p142 = scmp.eq.s32.totalorder %s31, 1
      %p143 = por %p141, %p142
      %p145 = scmp.ne.s32.totalorder %s130, %s144
      %p146 = scmp.eq.s32.totalorder %s31, 0
      %p147 = por %p145, %p146
      %s149 = sadd.s32 %s148, 1
      %p152 = scmp.eq.s32.totalorder %s25, 1
      %p153 = scmp.ne.s32.totalorder %s148, %s150
      %p154 = scmp.eq.s32.totalorder %s25, 0
      %p155 = por %p153, %p154
      %p156 = scmp.ne.s32.totalorder %s148, %s150
      %p157 = scmp.eq.s32.totalorder %s30, 1
      %p158 = por %p156, %p157
      %p159 = scmp.ne.s32.totalorder %s150, %s151
      %p160 = scmp.eq.s32.totalorder %s30, 0
      %p161 = por %p159, %p160
      %p162 = scmp.ne.s32.totalorder %s150, %s151
      %p163 = scmp.eq.s32.totalorder %s31, 1
      %p164 = por %p162, %p163
      %p166 = scmp.ne.s32.totalorder %s151, %s165
      %p167 = scmp.eq.s32.totalorder %s31, 0
      %p168 = por %p166, %p167
      %s170 = sadd.s32 %s169, 1
      %p173 = scmp.eq.s32.totalorder %s25, 1
      %p174 = scmp.ne.s32.totalorder %s169, %s171
      %p175 = scmp.eq.s32.totalorder %s25, 0
      %p176 = por %p174, %p175
      %p177 = scmp.ne.s32.totalorder %s169, %s171
      %p178 = scmp.eq.s32.totalorder %s30, 1
      %p179 = por %p177, %p178
      %p180 = scmp.ne.s32.totalorder %s171, %s172
      %p181 = scmp.eq.s32.totalorder %s30, 0
      %p182 = por %p180, %p181
      %p183 = scmp.ne.s32.totalorder %s171, %s172
      %p184 = scmp.eq.s32.totalorder %s31, 1
      %p185 = por %p183, %p184
      %p187 = scmp.ne.s32.totalorder %s172, %s186
      %p188 = scmp.eq.s32.totalorder %s31, 0
      %p189 = por %p187, %p188
      %s191 = sadd.s32 %s190, 1
      %p194 = scmp.eq.s32.totalorder %s25, 1
      %p195 = scmp.ne.s32.totalorder %s190, %s192
      %p196 = scmp.eq.s32.totalorder %s25, 0
      %p197 = por %p195, %p196
      %p198 = scmp.ne.s32.totalorder %s190, %s192
      %p199 = scmp.eq.s32.totalorder %s30, 1
      %p200 = por %p198, %p199
      %p201 = scmp.ne.s32.totalorder %s192, %s193
      %p202 = scmp.eq.s32.totalorder %s30, 0
      %p203 = por %p201, %p202
      %p204 = scmp.ne.s32.totalorder %s192, %s193
      %p205 = scmp.eq.s32.totalorder %s31, 1
      %p206 = por %p204, %p205
      %p208 = scmp.ne.s32.totalorder %s193, %s207
      %p209 = scmp.eq.s32.totalorder %s31, 0
      %p210 = por %p208, %p209
      %s212 = sadd.s32 %s211, 1
      %p215 = scmp.eq.s32.totalorder %s25, 1
      %p216 = scmp.ne.s32.totalorder %s211, %s213
      %p217 = scmp.eq.s32.totalorder %s25, 0
      %p218 = por %p216, %p217
      %p219 = scmp.ne.s32.totalorder %s211, %s213
      %p220 = scmp.eq.s32.totalorder %s30, 1
      %p221 = por %p219, %p220
      %p222 = scmp.ne.s32.totalorder %s213, %s214
      %p223 = scmp.eq.s32.totalorder %s30, 0
      %p224 = por %p222, %p223
      %p225 = scmp.ne.s32.totalorder %s213, %s214
      %p226 = scmp.eq.s32.totalorder %s31, 1
      %p227 = por %p225, %p226
      %p229 = scmp.ne.s32.totalorder %s214, %s228
      %p230 = scmp.eq.s32.totalorder %s31, 0
      %p231 = por %p229, %p230
      %s233 = sadd.s32 %s232, 1
      %p236 = scmp.eq.s32.totalorder %s25, 1
      %p237 = scmp.ne.s32.totalorder %s232, %s234
      %p238 = scmp.eq.s32.totalorder %s25, 0
      %p239 = por %p237, %p238
      %p240 = scmp.ne.s32.totalorder %s232, %s234
      %p241 = scmp.eq.s32.totalorder %s30, 1
      %p242 = por %p240, %p241
      %p243 = scmp.ne.s32.totalorder %s234, %s235
      %p244 = scmp.eq.s32.totalorder %s30, 0
      %p245 = por %p243, %p244
      %p246 = scmp.ne.s32.totalorder %s234, %s235
      %p247 = scmp.eq.s32.totalorder %s31, 1
      %p248 = por %p246, %p247
      %p250 = scmp.ne.s32.totalorder %s235, %s249
      %p251 = scmp.eq.s32.totalorder %s31, 0
      %p252 = por %p250, %p251
      %s253 = ssub.s32 %s25, %s32
      %p254 = scmp.eq.s32.totalorder %s253, 0
      %s256 = sadd.s32 %s255, 1
      %s257 = scalar_select %p254, %s255, %s256
      %p260 = pneg %p254
      %p261 = scmp.eq.s32.totalorder %s25, 1
      %p262 = por %p260, %p261
      %p263 = scmp.ne.s32.totalorder %s255, %s258
      %p264 = scmp.eq.s32.totalorder %s25, 0
      %p265 = por %p263, %p264
      %p266 = scmp.ne.s32.totalorder %s255, %s258
      %p267 = scmp.eq.s32.totalorder %s30, 1
      %p268 = por %p266, %p267
      %p269 = scmp.ne.s32.totalorder %s258, %s259
      %p270 = scmp.eq.s32.totalorder %s30, 0
      %p271 = por %p269, %p270
      %p272 = scmp.ne.s32.totalorder %s258, %s259
      %p273 = scmp.eq.s32.totalorder %s31, 1
      %p274 = por %p272, %p273
      %p276 = scmp.ne.s32.totalorder %s259, %s275
      %p277 = scmp.eq.s32.totalorder %s31, 0
      %p278 = por %p276, %p277
      %p279 = scmp.le.s32.totalorder 1, %s25
      %p280 = scmp.lt.s32.totalorder %s25, 3
      %p281 = pnand %p279, %p280
      %p282 = pneg %p281
      // Predicated region
      $region9: #{tpu_custom_call.1} parent=5 // pred_check
        _
      $region10: #{tpu_custom_call.1} parent=5 // pred_check_branch
        %284 = sbr.rel (%p281) target = $region12
      $region11: #{tpu_custom_call.1} parent=5 // pred_region
        %s285 = ssub.s32 %s25, 1
        // Predicated region
        $region13: #{tpu_custom_call.1} parent=11 // pred_check
          %p286 = pneg %p98
        $region14: #{tpu_custom_call.1} parent=11 // pred_check_branch
          %288 = sbr.rel (%p286) target = $region16
        $region15: #{tpu_custom_call.1} parent=11 // pred_region
          %290 = vsyncadd [#allocation6], 0
          %s291 = sshll.u32 %s2, 4
          %s292 = int_to_ptr.hbm [resolvable:$true] %s291
          %s293 = sshll.u32 [#allocation5], 4
          %s294 = int_to_ptr.vmem [resolvable:$true] %s293
          %299 = dma.hbm_to_vmem [thread:$0]  %s292, 256, %s294, [#allocation6], 128, 128, 8
        $region16: #{tpu_custom_call.1} parent=11 // pred_fallthru
          _
        // Predicated region
        $region17: #{tpu_custom_call.1} parent=11 // pred_check
          %p300 = pneg %p119
        $region18: #{tpu_custom_call.1} parent=11 // pred_check_branch
          %302 = sbr.rel (%p300) target = $region20
        $region19: #{tpu_custom_call.1} parent=11 // pred_region
          %304 = vsyncadd [#allocation6], 0
          %s305 = sshll.u32 %s3, 4
          %s306 = int_to_ptr.hbm [resolvable:$true] %s305
          %s307 = sshll.u32 [#allocation7], 4
          %s308 = int_to_ptr.vmem [resolvable:$true] %s307
          %313 = dma.hbm_to_vmem [thread:$0]  %s306, 128, %s308, [#allocation6], 64, 64, 4
        $region20: #{tpu_custom_call.1} parent=11 // pred_fallthru
          _
        // Predicated region
        $region21: #{tpu_custom_call.1} parent=11 // pred_check
          %p314 = pneg %p140
        $region22: #{tpu_custom_call.1} parent=11 // pred_check_branch
          %316 = sbr.rel (%p314) target = $region24
        $region23: #{tpu_custom_call.1} parent=11 // pred_region
          %318 = vsyncadd [#allocation9], 0
          %s319 = sshll.u32 %s4, 4
          %s320 = int_to_ptr.hbm [resolvable:$true] %s319
          %s321 = sshll.u32 [#allocation8], 4
          %s322 = int_to_ptr.vmem [resolvable:$true] %s321
          %327 = dma.hbm_to_vmem [thread:$0]  %s320, 256, %s322, [#allocation9], 128, 128, 8
        $region24: #{tpu_custom_call.1} parent=11 // pred_fallthru
          _
        // Predicated region
        $region25: #{tpu_custom_call.1} parent=11 // pred_check
          %p328 = pneg %p161
        $region26: #{tpu_custom_call.1} parent=11 // pred_check_branch
          %330 = sbr.rel (%p328) target = $region28
        $region27: #{tpu_custom_call.1} parent=11 // pred_region
          %332 = vsyncadd [#allocation9], 0
          %s333 = sshll.u32 %s5, 4
          %s334 = int_to_ptr.hbm [resolvable:$true] %s333
          %s335 = sshll.u32 [#allocation10], 4
          %s336 = int_to_ptr.vmem [resolvable:$true] %s335
          %341 = dma.hbm_to_vmem [thread:$0]  %s334, 768, %s336, [#allocation9], 128, 128, 8
        $region28: #{tpu_custom_call.1} parent=11 // pred_fallthru
          _
        // Predicated region
        $region29: #{tpu_custom_call.1} parent=11 // pred_check
          %p342 = pneg %p182
        $region30: #{tpu_custom_call.1} parent=11 // pred_check_branch
          %344 = sbr.rel (%p342) target = $region32
        $region31: #{tpu_custom_call.1} parent=11 // pred_region
          _
        $region32: #{tpu_custom_call.1} parent=11 // pred_fallthru
          _
        // Predicated region
        $region33: #{tpu_custom_call.1} parent=11 // pred_check
          %p345 = pneg %p203
        $region34: #{tpu_custom_call.1} parent=11 // pred_check_branch
          %347 = sbr.rel (%p345) target = $region36
        $region35: #{tpu_custom_call.1} parent=11 // pred_region
          %349 = vsyncadd [#allocation12], 0
          %s350 = sshll.u32 %s7, 4
          %s351 = int_to_ptr.hbm [resolvable:$true] %s350
          %s352 = sshll.u32 [#allocation11], 4
          %s353 = int_to_ptr.vmem [resolvable:$true] %s352
          %358 = dma.hbm_to_vmem [thread:$0]  %s351, 512, %s353, [#allocation12], 128, 128, 8
        $region36: #{tpu_custom_call.1} parent=11 // pred_fallthru
          _
        // Predicated region
        $region37: #{tpu_custom_call.1} parent=11 // pred_check
          %p359 = pneg %p224
        $region38: #{tpu_custom_call.1} parent=11 // pred_check_branch
          %361 = sbr.rel (%p359) target = $region40
        $region39: #{tpu_custom_call.1} parent=11 // pred_region
          _
        $region40: #{tpu_custom_call.1} parent=11 // pred_fallthru
          _
        // Predicated region
        $region41: #{tpu_custom_call.1} parent=11 // pred_check
          %p362 = pneg %p245
        $region42: #{tpu_custom_call.1} parent=11 // pred_check_branch
          %364 = sbr.rel (%p362) target = $region44
        $region43: #{tpu_custom_call.1} parent=11 // pred_region
          %366 = vsyncadd [#allocation12], 0
          %s367 = sshll.u32 %s9, 4
          %s368 = int_to_ptr.hbm [resolvable:$true] %s367
          %s369 = sshll.u32 [#allocation13], 4
          %s370 = int_to_ptr.vmem [resolvable:$true] %s369
          %375 = dma.hbm_to_vmem [thread:$0]  %s368, 256, %s370, [#allocation12], 128, 128, 8
        $region44: #{tpu_custom_call.1} parent=11 // pred_fallthru
          _
      $region12: #{tpu_custom_call.1} parent=5 // pred_fallthru
        _
      %p376 = scmp.lt.s32.totalorder %s25, 2
      // Predicated region
      $region45: #{tpu_custom_call.1} parent=5 // pred_check
        %p377 = pneg %p376
      $region46: #{tpu_custom_call.1} parent=5 // pred_check_branch
        %379 = sbr.rel (%p377) target = $region48
      $region47: #{tpu_custom_call.1} parent=5 // pred_region
        // Predicated region
        $region49: #{tpu_custom_call.1} parent=47 // pred_check
          %p380 = pneg %p45
        $region50: #{tpu_custom_call.1} parent=47 // pred_check_branch
          %382 = sbr.rel (%p380) target = $region52
        $region51: #{tpu_custom_call.1} parent=47 // pred_region
          %s383 = sand.u32 %s35, 1
          %s384 = scalar_lea.sflag [#allocation3], %s383
          %s385 = sand.u32 %s35, 1
          %s386 = smul.addr %s385, 8
          %s387 = scalar_lea.vmem [#allocation2], %s386
          %389 = vsyncadd %s384, 0
          %s390 = smul.addr %s25, 8
          %s391 = scalar_lea.hbm %s0, %s390
          %s393 = sshll.u32 %s391, 4
          %s394 = int_to_ptr.hbm [resolvable:$true] %s393
          %s395 = sshll.u32 %s387, 4
          %s396 = int_to_ptr.vmem [resolvable:$true] %s395
          %398 = dma.hbm_to_vmem [thread:$0]  %s394, 128, %s396, %s384
        $region52: #{tpu_custom_call.1} parent=47 // pred_fallthru
          _
        // Predicated region
        $region53: #{tpu_custom_call.1} parent=47 // pred_check
          %p399 = pneg %p71
        $region54: #{tpu_custom_call.1} parent=47 // pred_check_branch
          %401 = sbr.rel (%p399) target = $region56
        $region55: #{tpu_custom_call.1} parent=47 // pred_region
          %p402 = scmp.lt.s32.totalorder %s25, 1
          %s403 = scalar_select %p402, %s25, 1
          %s404 = smul.addr %s403, 8
          %s405 = scalar_lea.vmem %s1, %s404
        $region56: #{tpu_custom_call.1} parent=47 // pred_fallthru
          _
      $region48: #{tpu_custom_call.1} parent=5 // pred_fallthru
        _
      %p406 = scmp.le.s32.totalorder 1, %s25
      %p407 = scmp.lt.s32.totalorder %s25, 3
      %p408 = pnand %p406, %p407
      %p409 = pneg %p408
      // Predicated region
      $region57: #{tpu_custom_call.1} parent=5 // pred_check
        _
      $region58: #{tpu_custom_call.1} parent=5 // pred_check_branch
        %411 = sbr.rel (%p408) target = $region60
      $region59: #{tpu_custom_call.1} parent=5 // pred_region
        %s412 = ssub.s32 %s25, 1
        %s413 = sand.u32 %s38, 1
        %s414 = scalar_lea.sflag [#allocation3], %s413
        %s415 = sand.u32 %s38, 1
        %s416 = smul.addr %s415, 8
        %s417 = scalar_lea.vmem [#allocation2], %s416
        // Predicated region
        $region61: #{tpu_custom_call.1} parent=59 // pred_check
          %p418 = pneg %p51
        $region62: #{tpu_custom_call.1} parent=59 // pred_check_branch
          %420 = sbr.rel (%p418) target = $region64
        $region63: #{tpu_custom_call.1} parent=59 // pred_region
          %422 = dma.done %s414, 128
        $region64: #{tpu_custom_call.1} parent=59 // pred_fallthru
          _
        // Predicated region
        $region65: #{tpu_custom_call.1} parent=59 // pred_check
          %p423 = pneg %p98
        $region66: #{tpu_custom_call.1} parent=59 // pred_check_branch
          %425 = sbr.rel (%p423) target = $region68
        $region67: #{tpu_custom_call.1} parent=59 // pred_region
          %427 = dma.done [#allocation6], 256
        $region68: #{tpu_custom_call.1} parent=59 // pred_fallthru
          _
        // Predicated region
        $region69: #{tpu_custom_call.1} parent=59 // pred_check
          %p428 = pneg %p119
        $region70: #{tpu_custom_call.1} parent=59 // pred_check_branch
          %430 = sbr.rel (%p428) target = $region72
        $region71: #{tpu_custom_call.1} parent=59 // pred_region
          %432 = dma.done [#allocation6], 128
        $region72: #{tpu_custom_call.1} parent=59 // pred_fallthru
          _
        // Predicated region
        $region73: #{tpu_custom_call.1} parent=59 // pred_check
          %p433 = pneg %p140
        $region74: #{tpu_custom_call.1} parent=59 // pred_check_branch
          %435 = sbr.rel (%p433) target = $region76
        $region75: #{tpu_custom_call.1} parent=59 // pred_region
          %437 = dma.done [#allocation9], 256
        $region76: #{tpu_custom_call.1} parent=59 // pred_fallthru
          _
        // Predicated region
        $region77: #{tpu_custom_call.1} parent=59 // pred_check
          %p438 = pneg %p161
        $region78: #{tpu_custom_call.1} parent=59 // pred_check_branch
          %440 = sbr.rel (%p438) target = $region80
        $region79: #{tpu_custom_call.1} parent=59 // pred_region
          %442 = dma.done [#allocation9], 768
        $region80: #{tpu_custom_call.1} parent=59 // pred_fallthru
          _
        // Predicated region
        $region81: #{tpu_custom_call.1} parent=59 // pred_check
          %p443 = pneg %p203
        $region82: #{tpu_custom_call.1} parent=59 // pred_check_branch
          %445 = sbr.rel (%p443) target = $region84
        $region83: #{tpu_custom_call.1} parent=59 // pred_region
          %447 = dma.done [#allocation12], 512
        $region84: #{tpu_custom_call.1} parent=59 // pred_fallthru
          _
        // Predicated region
        $region85: #{tpu_custom_call.1} parent=59 // pred_check
          %p448 = pneg %p245
        $region86: #{tpu_custom_call.1} parent=59 // pred_check_branch
          %450 = sbr.rel (%p448) target = $region88
        $region87: #{tpu_custom_call.1} parent=59 // pred_region
          %452 = dma.done [#allocation12], 256
        $region88: #{tpu_custom_call.1} parent=59 // pred_fallthru
          _
        %s453 = sand.u32 %s38, 1
        %s454 = scalar_lea.sflag [#allocation3], %s453
        %s455 = sand.u32 %s38, 1
        %s456 = smul.addr %s455, 8
        %s457 = scalar_lea.vmem [#allocation2], %s456
        %p458 = pneg %p51
        %p459 = pneg %p48
        %p460 = scmp.lt.s32.totalorder %s30, 1
        %s461 = scalar_select %p460, %s30, 1
        %s462 = smul.addr %s461, 8
        %s463 = scalar_lea.vmem %s1, %s462
        %p464 = pneg %p77
        %p465 = pneg %p74
        %p466 = pneg %p98
        %p467 = pneg %p95
        %p468 = pneg %p119
        %p469 = pneg %p116
        %p470 = pneg %p140
        %p471 = pneg %p137
        %p472 = pneg %p161
        %p473 = pneg %p158
        %p474 = pneg %p182
        %p475 = pneg %p179
        %p476 = pneg %p203
        %p477 = pneg %p200
        %p478 = pneg %p224
        %p479 = pneg %p221
        %p480 = pneg %p245
        %p481 = pneg %p242
        %p482 = pneg %p271
        %p483 = pneg %p268
        %s484 = sand.u32 %s258, 1
        %s485 = scalar_lea.sflag [#allocation4], %s484
        %s486 = sand.u32 %s258, 1
        %s487 = smul.addr %s486, 8
        %s488 = scalar_lea.vmem [#allocation14], %s487
        %p489 = scmp.lt.s32.totalorder %s30, 1
        %s490 = scalar_select %p489, %s30, 1
        %s491 = smul.addr %s490, 8
        %s492 = scalar_lea.vmem %s1, %s491
        %v493 = vld [vmem:[%s417] sm:$0xff]
        %v494 = vld [vmem:[%s492] sm:$0xff]
        %v495 = vld [vmem:[%s8] sm:$0xff]
        %v496 = vld [vmem:[#allocation13] sm:$0x1]
        %v497 = vld [vmem:[#allocation13 + $0x1] sm:$0x1]
        %v498 = vld [vmem:[#allocation13 + $0x2] sm:$0x1]
        %v499 = vld [vmem:[#allocation13 + $0x3] sm:$0x1]
        %v500 = vld [vmem:[#allocation13 + $0x4] sm:$0x1]
        %v501 = vld [vmem:[#allocation13 + $0x5] sm:$0x1]
        %v502 = vld [vmem:[#allocation13 + $0x6] sm:$0x1]
        %v503 = vld [vmem:[#allocation5] sm:$0xff]
        %505 = vset.pattern.permute.xlu0 0
        %506 = vperm.xlu0 %505, %v495
        %v507 = vpop.permute.xlu0 %506
        %vm509 = vcmask 64512
        %v511 = vsel %vm509, %v503, 0
        %513 = vmatpush.msra.mxu0 0.0
        %514 = vmatpush.msra.mxu0 0.0
        %515 = vmatpush.msra.mxu0 0.0
        %516 = vmatpush.msra.mxu0 0.0
        %517 = vmatpush.msra.mxu0 0.0
        %518 = vmatpush.msra.mxu0 0.0
        %519 = vmatpush.msra.mxu0 0.0
        %520 = vmatpush.msra.mxu0 0.0
        %521 = vmatpush.msra.mxu0 0.0
        %522 = vmatpush.msra.mxu0 0.0
        %523 = vmatpush.msra.mxu0 0.0
        %524 = vmatpush.msra.mxu0 0.0
        %525 = vmatpush.msra.mxu0 0.0
        %526 = vmatpush.msra.mxu0 0.0
        %527 = vmatpush.msra.mxu0 0.0
        %528 = vmatpush.msra.mxu0 %v493
        %529 = vmatmul.f32.gmra.mxu0 %v511
        %v530 = vpop.f32.mrf.mxu0
        %v531 = vadd.f32 %v507, %v530
        %532 = vdwg.mxu0
        %v533 = vmax.f32 %v531, 0.0
        %v534 = vadd.f32 %v493, %v533
        %535 = vset.pattern.permute.xlu0 1
        %536 = vperm.xlu0 %535, %v495
        %v537 = vpop.permute.xlu0 %536
        %v539 = vmul.f32 %v534, %v537
        %540 = vset.pattern.permute.xlu0 2
        %541 = vperm.xlu0 %540, %v495
        %v542 = vpop.permute.xlu0 %541
        %v544 = vadd.f32 %v539, %v542
        %v545 = vld [vmem:[#allocation7] sm:$0xf]
        %v546 = vperm.slane %v496, 0
        %vm547 = vcmask 31744
        %v549 = vsel %vm547, %v494, 0
        %vm551 = vcmask 1043456
        %v553 = vsel %vm551, %v545, 0
        %555 = vmatpush.msra.mxu0 0.0
        %556 = vmatpush.msra.mxu0 0.0
        %557 = vmatpush.msra.mxu0 0.0
        %558 = vmatpush.msra.mxu0 0.0
        %559 = vmatpush.msra.mxu0 0.0
        %560 = vmatpush.msra.mxu0 0.0
        %561 = vmatpush.msra.mxu0 0.0
        %562 = vmatpush.msra.mxu0 0.0
        %563 = vmatpush.msra.mxu0 0.0
        %564 = vmatpush.msra.mxu0 0.0
        %565 = vmatpush.msra.mxu0 0.0
        %566 = vmatpush.msra.mxu0 0.0
        %567 = vmatpush.msra.mxu0 0.0
        %568 = vmatpush.msra.mxu0 0.0
        %569 = vmatpush.msra.mxu0 0.0
        %570 = vmatpush.msra.mxu0 %v553
        %571 = vmatmul.f32.gmra.mxu0 %v549
        %v572 = vpop.f32.mrf.mxu0
        %v573 = vadd.f32 %v546, %v572
        %574 = vdwg.mxu0
        %v575 = vmax.f32 %v573, 0.0
        %v576 = vld [vmem:[#allocation8] sm:$0xff]
        %v578 = vsel %vm509, %v575, 0
        %580 = vmatpush.msra.mxu0 0.0
        %581 = vmatpush.msra.mxu0 0.0
        %582 = vmatpush.msra.mxu0 0.0
        %583 = vmatpush.msra.mxu0 0.0
        %584 = vmatpush.msra.mxu0 0.0
        %585 = vmatpush.msra.mxu0 0.0
        %586 = vmatpush.msra.mxu0 0.0
        %587 = vmatpush.msra.mxu0 0.0
        %588 = vmatpush.msra.mxu0 0.0
        %589 = vmatpush.msra.mxu0 0.0
        %590 = vmatpush.msra.mxu0 0.0
        %591 = vmatpush.msra.mxu0 0.0
        %592 = vmatpush.msra.mxu0 0.0
        %593 = vmatpush.msra.mxu0 0.0
        %594 = vmatpush.msra.mxu0 0.0
        %595 = vmatpush.msra.mxu0 %v576
        %596 = vmatmul.f32.gmra.mxu0 %v578
        %v597 = vpop.f32.mrf.mxu0
        %v598 = vadd.f32 0.0, %v597
        %599 = vdwg.mxu0
        %601 = vrot.lane.b32.xlu0 %v598, 8
        %v602 = vpop.permute.xlu0 %601
        %v604 = vadd.f32 %v573, %v602
        %v605 = vperm.slane %v497, 0
        %607 = vrot.lane.b32.xlu0 %v605, 8
        %v608 = vpop.permute.xlu0 %607
        %v610 = vmul.f32 %v604, %v608
        %v611 = vperm.slane %v498, 0
        %613 = vrot.lane.b32.xlu0 %v611, 8
        %v614 = vpop.permute.xlu0 %613
        %v616 = vadd.f32 %v610, %v614
        %v617 = vld [vmem:[#allocation10] sm:$0xff]
        %v618 = vld [vmem:[#allocation10 + $0x8] sm:$0xff]
        %v619 = vld [vmem:[#allocation10 + $0x10] sm:$0xff]
        %621 = vrot.lane.b32.xlu0 %v616, 120
        %v622 = vpop.permute.xlu0 %621
        %v623 = vsel %vm509, %v622, 0
        %625 = vmatpush.msra.mxu0 0.0
        %626 = vmatpush.msra.mxu0 0.0
        %627 = vmatpush.msra.mxu0 0.0
        %628 = vmatpush.msra.mxu0 0.0
        %629 = vmatpush.msra.mxu0 0.0
        %630 = vmatpush.msra.mxu0 0.0
        %631 = vmatpush.msra.mxu0 0.0
        %632 = vmatpush.msra.mxu0 0.0
        %633 = vmatpush.msra.mxu0 0.0
        %634 = vmatpush.msra.mxu0 0.0
        %635 = vmatpush.msra.mxu0 0.0
        %636 = vmatpush.msra.mxu0 0.0
        %637 = vmatpush.msra.mxu0 0.0
        %638 = vmatpush.msra.mxu0 0.0
        %639 = vmatpush.msra.mxu0 0.0
        %640 = vmatpush.msra.mxu0 %v619
        %641 = vmatmul.f32.gmra.mxu0 %v623
        %v642 = vpop.f32.mrf.mxu0
        %v643 = vadd.f32 0.0, %v642
        %644 = vdwg.mxu0
        %vm645 = vcmask 130048
        %v647 = vsel %vm645, %v544, 0
        %649 = vmatpush.msra.mxu0 0.0
        %650 = vmatpush.msra.mxu0 0.0
        %651 = vmatpush.msra.mxu0 0.0
        %652 = vmatpush.msra.mxu0 0.0
        %653 = vmatpush.msra.mxu0 0.0
        %654 = vmatpush.msra.mxu0 0.0
        %655 = vmatpush.msra.mxu0 0.0
        %656 = vmatpush.msra.mxu0 0.0
        %657 = vmatpush.msra.mxu0 0.0
        %658 = vmatpush.msra.mxu0 0.0
        %659 = vmatpush.msra.mxu0 0.0
        %660 = vmatpush.msra.mxu0 0.0
        %661 = vmatpush.msra.mxu0 0.0
        %662 = vmatpush.msra.mxu0 0.0
        %663 = vmatpush.msra.mxu0 %v618
        %664 = vmatpush.msra.mxu0 %v617
        %665 = vmatmul.f32.gmra.mxu0 %v647
        %v666 = vpop.f32.mrf.mxu0
        %v667 = vadd.f32 %v643, %v666
        %668 = vdwg.mxu0
        %v669 = vperm.slane %v499, 0
        %v670 = vadd.f32 %v667, %v669
        %v671 = vmax.f32 %v670, 0.0
        %v672 = vld [vmem:[%s6] sm:$0xff]
        %v673 = vld [vmem:[%s6 + $0x8] sm:$0xff]
        %v675 = vsel %vm645, %v671, 0
        %677 = vmatpush.msra.mxu0 0.0
        %678 = vmatpush.msra.mxu0 0.0
        %679 = vmatpush.msra.mxu0 0.0
        %680 = vmatpush.msra.mxu0 0.0
        %681 = vmatpush.msra.mxu0 0.0
        %682 = vmatpush.msra.mxu0 0.0
        %683 = vmatpush.msra.mxu0 0.0
        %684 = vmatpush.msra.mxu0 0.0
        %685 = vmatpush.msra.mxu0 0.0
        %686 = vmatpush.msra.mxu0 0.0
        %687 = vmatpush.msra.mxu0 0.0
        %688 = vmatpush.msra.mxu0 0.0
        %689 = vmatpush.msra.mxu0 0.0
        %690 = vmatpush.msra.mxu0 0.0
        %691 = vmatpush.msra.mxu0 %v673
        %692 = vmatpush.msra.mxu0 %v672
        %693 = vmatmul.f32.gmra.mxu0 %v675
        %v694 = vpop.f32.mrf.mxu0
        %v695 = vadd.f32 0.0, %v694
        %696 = vdwg.mxu0
        %698 = vrot.lane.b32.xlu0 %v695, 16
        %v699 = vpop.permute.xlu0 %698
        %v701 = vadd.f32 %v670, %v699
        %v702 = vperm.slane %v500, 0
        %704 = vrot.lane.b32.xlu0 %v702, 16
        %v705 = vpop.permute.xlu0 %704
        %v707 = vmul.f32 %v701, %v705
        %v708 = vperm.slane %v501, 0
        %710 = vrot.lane.b32.xlu0 %v708, 16
        %v711 = vpop.permute.xlu0 %710
        %v713 = vadd.f32 %v707, %v711
        %v714 = vld [vmem:[#allocation11] sm:$0xff]
        %v715 = vld [vmem:[#allocation11 + $0x8] sm:$0xff]
        %v716 = vperm.slane %v502, 0
        %718 = vrot.lane.b32.xlu0 %v713, 112
        %v719 = vpop.permute.xlu0 %718
        %v720 = vsel %vm645, %v719, 0
        %722 = vmatpush.msra.mxu0 0.0
        %723 = vmatpush.msra.mxu0 0.0
        %724 = vmatpush.msra.mxu0 0.0
        %725 = vmatpush.msra.mxu0 0.0
        %726 = vmatpush.msra.mxu0 0.0
        %727 = vmatpush.msra.mxu0 0.0
        %728 = vmatpush.msra.mxu0 0.0
        %729 = vmatpush.msra.mxu0 0.0
        %730 = vmatpush.msra.mxu0 0.0
        %731 = vmatpush.msra.mxu0 0.0
        %732 = vmatpush.msra.mxu0 0.0
        %733 = vmatpush.msra.mxu0 0.0
        %734 = vmatpush.msra.mxu0 0.0
        %735 = vmatpush.msra.mxu0 0.0
        %736 = vmatpush.msra.mxu0 %v715
        %737 = vmatpush.msra.mxu0 %v714
        %738 = vmatmul.f32.gmra.mxu0 %v720
        %v739 = vpop.f32.mrf.mxu0
        %v740 = vadd.f32 %v716, %v739
        %741 = vdwg.mxu0
        %s742 = scalar_lea.vmem %s8, 8
        %v743 = vld [vmem:[%s742] sm:$0xff]
        %s744 = scalar_lea.vmem [#allocation13], 8
        %v745 = vld [vmem:[%s744] sm:$0x1]
        %v746 = vld [vmem:[%s744 + $0x1] sm:$0x1]
        %v747 = vld [vmem:[%s744 + $0x2] sm:$0x1]
        %v748 = vld [vmem:[%s744 + $0x3] sm:$0x1]
        %v749 = vld [vmem:[%s744 + $0x4] sm:$0x1]
        %v750 = vld [vmem:[%s744 + $0x5] sm:$0x1]
        %v751 = vld [vmem:[%s744 + $0x6] sm:$0x1]
        %s752 = scalar_lea.vmem [#allocation5], 8
        %v753 = vld [vmem:[%s752] sm:$0xff]
        %755 = vset.pattern.permute.xlu0 0
        %756 = vperm.xlu0 %755, %v743
        %v757 = vpop.permute.xlu0 %756
        %v760 = vsel %vm509, %v753, 0
        %762 = vmatpush.msra.mxu0 0.0
        %763 = vmatpush.msra.mxu0 0.0
        %764 = vmatpush.msra.mxu0 0.0
        %765 = vmatpush.msra.mxu0 0.0
        %766 = vmatpush.msra.mxu0 0.0
        %767 = vmatpush.msra.mxu0 0.0
        %768 = vmatpush.msra.mxu0 0.0
        %769 = vmatpush.msra.mxu0 0.0
        %770 = vmatpush.msra.mxu0 0.0
        %771 = vmatpush.msra.mxu0 0.0
        %772 = vmatpush.msra.mxu0 0.0
        %773 = vmatpush.msra.mxu0 0.0
        %774 = vmatpush.msra.mxu0 0.0
        %775 = vmatpush.msra.mxu0 0.0
        %776 = vmatpush.msra.mxu0 0.0
        %777 = vmatpush.msra.mxu0 %v740
        %778 = vmatmul.f32.gmra.mxu0 %v760
        %v779 = vpop.f32.mrf.mxu0
        %v780 = vadd.f32 %v757, %v779
        %781 = vdwg.mxu0
        %v782 = vmax.f32 %v780, 0.0
        %v783 = vadd.f32 %v740, %v782
        %784 = vset.pattern.permute.xlu0 1
        %785 = vperm.xlu0 %784, %v743
        %v786 = vpop.permute.xlu0 %785
        %v788 = vmul.f32 %v783, %v786
        %789 = vset.pattern.permute.xlu0 2
        %790 = vperm.xlu0 %789, %v743
        %v791 = vpop.permute.xlu0 %790
        %v793 = vadd.f32 %v788, %v791
        %s794 = scalar_lea.vmem [#allocation7], 4
        %v795 = vld [vmem:[%s794] sm:$0xf]
        %v796 = vperm.slane %v745, 0
        %v798 = vsel %vm551, %v795, 0
        %800 = vmatpush.msra.mxu0 0.0
        %801 = vmatpush.msra.mxu0 0.0
        %802 = vmatpush.msra.mxu0 0.0
        %803 = vmatpush.msra.mxu0 0.0
        %804 = vmatpush.msra.mxu0 0.0
        %805 = vmatpush.msra.mxu0 0.0
        %806 = vmatpush.msra.mxu0 0.0
        %807 = vmatpush.msra.mxu0 0.0
        %808 = vmatpush.msra.mxu0 0.0
        %809 = vmatpush.msra.mxu0 0.0
        %810 = vmatpush.msra.mxu0 0.0
        %811 = vmatpush.msra.mxu0 0.0
        %812 = vmatpush.msra.mxu0 0.0
        %813 = vmatpush.msra.mxu0 0.0
        %814 = vmatpush.msra.mxu0 0.0
        %815 = vmatpush.msra.mxu0 %v798
        %816 = vmatmul.f32.gmra.mxu0 %v549
        %v817 = vpop.f32.mrf.mxu0
        %v818 = vadd.f32 %v796, %v817
        %819 = vdwg.mxu0
        %v820 = vmax.f32 %v818, 0.0
        %s821 = scalar_lea.vmem [#allocation8], 8
        %v822 = vld [vmem:[%s821] sm:$0xff]
        %v824 = vsel %vm509, %v820, 0
        %826 = vmatpush.msra.mxu0 0.0
        %827 = vmatpush.msra.mxu0 0.0
        %828 = vmatpush.msra.mxu0 0.0
        %829 = vmatpush.msra.mxu0 0.0
        %830 = vmatpush.msra.mxu0 0.0
        %831 = vmatpush.msra.mxu0 0.0
        %832 = vmatpush.msra.mxu0 0.0
        %833 = vmatpush.msra.mxu0 0.0
        %834 = vmatpush.msra.mxu0 0.0
        %835 = vmatpush.msra.mxu0 0.0
        %836 = vmatpush.msra.mxu0 0.0
        %837 = vmatpush.msra.mxu0 0.0
        %838 = vmatpush.msra.mxu0 0.0
        %839 = vmatpush.msra.mxu0 0.0
        %840 = vmatpush.msra.mxu0 0.0
        %841 = vmatpush.msra.mxu0 %v822
        %842 = vmatmul.f32.gmra.mxu0 %v824
        %v843 = vpop.f32.mrf.mxu0
        %v844 = vadd.f32 0.0, %v843
        %845 = vdwg.mxu0
        %847 = vrot.lane.b32.xlu0 %v844, 8
        %v848 = vpop.permute.xlu0 %847
        %v850 = vadd.f32 %v818, %v848
        %v851 = vperm.slane %v746, 0
        %853 = vrot.lane.b32.xlu0 %v851, 8
        %v854 = vpop.permute.xlu0 %853
        %v856 = vmul.f32 %v850, %v854
        %v857 = vperm.slane %v747, 0
        %859 = vrot.lane.b32.xlu0 %v857, 8
        %v860 = vpop.permute.xlu0 %859
        %v862 = vadd.f32 %v856, %v860
        %s863 = scalar_lea.vmem [#allocation10], 24
        %v864 = vld [vmem:[%s863] sm:$0xff]
        %v865 = vld [vmem:[%s863 + $0x8] sm:$0xff]
        %v866 = vld [vmem:[%s863 + $0x10] sm:$0xff]
        %868 = vrot.lane.b32.xlu0 %v862, 120
        %v869 = vpop.permute.xlu0 %868
        %v870 = vsel %vm509, %v869, 0
        %872 = vmatpush.msra.mxu0 0.0
        %873 = vmatpush.msra.mxu0 0.0
        %874 = vmatpush.msra.mxu0 0.0
        %875 = vmatpush.msra.mxu0 0.0
        %876 = vmatpush.msra.mxu0 0.0
        %877 = vmatpush.msra.mxu0 0.0
        %878 = vmatpush.msra.mxu0 0.0
        %879 = vmatpush.msra.mxu0 0.0
        %880 = vmatpush.msra.mxu0 0.0
        %881 = vmatpush.msra.mxu0 0.0
        %882 = vmatpush.msra.mxu0 0.0
        %883 = vmatpush.msra.mxu0 0.0
        %884 = vmatpush.msra.mxu0 0.0
        %885 = vmatpush.msra.mxu0 0.0
        %886 = vmatpush.msra.mxu0 0.0
        %887 = vmatpush.msra.mxu0 %v866
        %888 = vmatmul.f32.gmra.mxu0 %v870
        %v889 = vpop.f32.mrf.mxu0
        %v890 = vadd.f32 0.0, %v889
        %891 = vdwg.mxu0
        %v893 = vsel %vm645, %v793, 0
        %895 = vmatpush.msra.mxu0 0.0
        %896 = vmatpush.msra.mxu0 0.0
        %897 = vmatpush.msra.mxu0 0.0
        %898 = vmatpush.msra.mxu0 0.0
        %899 = vmatpush.msra.mxu0 0.0
        %900 = vmatpush.msra.mxu0 0.0
        %901 = vmatpush.msra.mxu0 0.0
        %902 = vmatpush.msra.mxu0 0.0
        %903 = vmatpush.msra.mxu0 0.0
        %904 = vmatpush.msra.mxu0 0.0
        %905 = vmatpush.msra.mxu0 0.0
        %906 = vmatpush.msra.mxu0 0.0
        %907 = vmatpush.msra.mxu0 0.0
        %908 = vmatpush.msra.mxu0 0.0
        %909 = vmatpush.msra.mxu0 %v865
        %910 = vmatpush.msra.mxu0 %v864
        %911 = vmatmul.f32.gmra.mxu0 %v893
        %v912 = vpop.f32.mrf.mxu0
        %v913 = vadd.f32 %v890, %v912
        %914 = vdwg.mxu0
        %v915 = vperm.slane %v748, 0
        %v916 = vadd.f32 %v913, %v915
        %v917 = vmax.f32 %v916, 0.0
        %s918 = scalar_lea.vmem %s6, 16
        %v919 = vld [vmem:[%s918] sm:$0xff]
        %v920 = vld [vmem:[%s918 + $0x8] sm:$0xff]
        %v922 = vsel %vm645, %v917, 0
        %924 = vmatpush.msra.mxu0 0.0
        %925 = vmatpush.msra.mxu0 0.0
        %926 = vmatpush.msra.mxu0 0.0
        %927 = vmatpush.msra.mxu0 0.0
        %928 = vmatpush.msra.mxu0 0.0
        %929 = vmatpush.msra.mxu0 0.0
        %930 = vmatpush.msra.mxu0 0.0
        %931 = vmatpush.msra.mxu0 0.0
        %932 = vmatpush.msra.mxu0 0.0
        %933 = vmatpush.msra.mxu0 0.0
        %934 = vmatpush.msra.mxu0 0.0
        %935 = vmatpush.msra.mxu0 0.0
        %936 = vmatpush.msra.mxu0 0.0
        %937 = vmatpush.msra.mxu0 0.0
        %938 = vmatpush.msra.mxu0 %v920
        %939 = vmatpush.msra.mxu0 %v919
        %940 = vmatmul.f32.gmra.mxu0 %v922
        %v941 = vpop.f32.mrf.mxu0
        %v942 = vadd.f32 0.0, %v941
        %943 = vdwg.mxu0
        %945 = vrot.lane.b32.xlu0 %v942, 16
        %v946 = vpop.permute.xlu0 %945
        %v948 = vadd.f32 %v916, %v946
        %v949 = vperm.slane %v749, 0
        %951 = vrot.lane.b32.xlu0 %v949, 16
        %v952 = vpop.permute.xlu0 %951
        %v954 = vmul.f32 %v948, %v952
        %v955 = vperm.slane %v750, 0
        %957 = vrot.lane.b32.xlu0 %v955, 16
        %v958 = vpop.permute.xlu0 %957
        %v960 = vadd.f32 %v954, %v958
        %s961 = scalar_lea.vmem [#allocation11], 16
        %v962 = vld [vmem:[%s961] sm:$0xff]
        %v963 = vld [vmem:[%s961 + $0x8] sm:$0xff]
        %v964 = vperm.slane %v751, 0
        %966 = vrot.lane.b32.xlu0 %v960, 112
        %v967 = vpop.permute.xlu0 %966
        %v968 = vsel %vm645, %v967, 0
        %970 = vmatpush.msra.mxu0 0.0
        %971 = vmatpush.msra.mxu0 0.0
        %972 = vmatpush.msra.mxu0 0.0
        %973 = vmatpush.msra.mxu0 0.0
        %974 = vmatpush.msra.mxu0 0.0
        %975 = vmatpush.msra.mxu0 0.0
        %976 = vmatpush.msra.mxu0 0.0
        %977 = vmatpush.msra.mxu0 0.0
        %978 = vmatpush.msra.mxu0 0.0
        %979 = vmatpush.msra.mxu0 0.0
        %980 = vmatpush.msra.mxu0 0.0
        %981 = vmatpush.msra.mxu0 0.0
        %982 = vmatpush.msra.mxu0 0.0
        %983 = vmatpush.msra.mxu0 0.0
        %984 = vmatpush.msra.mxu0 %v963
        %985 = vmatpush.msra.mxu0 %v962
        %986 = vmatmul.f32.gmra.mxu0 %v968
        %v987 = vpop.f32.mrf.mxu0
        %v988 = vadd.f32 %v964, %v987
        %989 = vdwg.mxu0
        %990 = vst.msk [vmem:[%s488] sm:$0xff] %vm645, %v988
        %s991 = sand.u32 %s258, 1
        %s992 = scalar_lea.sflag [#allocation4], %s991
        %s993 = sand.u32 %s258, 1
        %s994 = smul.addr %s993, 8
        %s995 = scalar_lea.vmem [#allocation14], %s994
        // Predicated region
        $region89: #{tpu_custom_call.1} parent=59 // pred_check
          %p996 = pneg %p268
        $region90: #{tpu_custom_call.1} parent=59 // pred_check_branch
          %998 = sbr.rel (%p996) target = $region92
        $region91: #{tpu_custom_call.1} parent=59 // pred_region
          %1000 = vsyncadd %s992, 0
          %s1001 = smul.addr %s30, 8
          %s1002 = scalar_lea.hbm %s10, %s1001
          %s1004 = sshll.u32 %s995, 4
          %s1005 = int_to_ptr.vmem [resolvable:$true] %s1004
          %s1006 = sshll.u32 %s1002, 4
          %s1007 = int_to_ptr.hbm [resolvable:$true] %s1006
          %1009 = dma.vmem_to_hbm [thread:$0]  %s1005, 128, %s1007, %s992
        $region92: #{tpu_custom_call.1} parent=59 // pred_fallthru
          _
      $region60: #{tpu_custom_call.1} parent=5 // pred_fallthru
        _
      %p1010 = scmp.le.s32.totalorder 2, %s25
      // Predicated region
      $region93: #{tpu_custom_call.1} parent=5 // pred_check
        %p1011 = pneg %p1010
      $region94: #{tpu_custom_call.1} parent=5 // pred_check_branch
        %1013 = sbr.rel (%p1011) target = $region96
      $region95: #{tpu_custom_call.1} parent=5 // pred_region
        %s1014 = ssub.s32 %s25, 2
        // Predicated region
        $region97: #{tpu_custom_call.1} parent=95 // pred_check
          %p1015 = pneg %p274
        $region98: #{tpu_custom_call.1} parent=95 // pred_check_branch
          %1017 = sbr.rel (%p1015) target = $region100
        $region99: #{tpu_custom_call.1} parent=95 // pred_region
          %s1018 = sand.u32 %s259, 1
          %s1019 = scalar_lea.sflag [#allocation4], %s1018
          %s1020 = sand.u32 %s259, 1
          %s1021 = smul.addr %s1020, 8
          %s1022 = scalar_lea.vmem [#allocation14], %s1021
          %1024 = dma.done %s1019, 128
        $region100: #{tpu_custom_call.1} parent=95 // pred_fallthru
          _
      $region96: #{tpu_custom_call.1} parent=5 // pred_fallthru
        _
    $region6: #{tpu_custom_call.1} parent=1 // loop_footer
      %s29 = sadd.s32 1, %s25
    $region7: #{tpu_custom_call.1} parent=1 // loop_footer_branch
      %24 = sbr.rel target = $region3
    $region8: #{tpu_custom_call.1} parent=1 // loop_exit
      _
    %1025 = vsyncpa [#allocation3], 1
    %s1026 = scalar_lea.sflag [#allocation3], 1
    %1027 = vsyncpa %s1026, 1
    %1028 = vsyncpa [#allocation6], 1
    %1029 = vsyncpa [#allocation9], 1
    %1030 = vsyncpa [#allocation12], 1
    %1031 = vsyncpa [#allocation4], 1
    %s1032 = scalar_lea.sflag [#allocation4], 1
    %1033 = vsyncpa %s1032, 1

</llo_original>
